<compile_context>
chip_gen: v6e
topology: v6e:2x2x1
jax: 0.10.0
libtpu: 0.0.40
codegen_flags: <defaults>
</compile_context>

<pallas_src>
import jax
import jax.numpy as jnp
from jax.experimental import pallas as pl
from jax.experimental.pallas import tpu as pltpu


def _round_up(x, m):
    return ((x + m - 1) // m) * m


def _vmem_limit_bytes():
    """Generation-aware VMEM budget: ~3/4 of per-core capacity (≈96 MiB on
    v5e/v6e's 128 MiB, ≈48 MiB on v7x's 64 MiB).  Conservative fallback (64 MiB
    capacity assumed) if the hardware query is unavailable."""
    cap = None
    try:
        cap = getattr(pltpu.get_tpu_info(), "vmem_capacity_bytes", None)
    except Exception:
        cap = None
    if not cap:
        cap = 64 << 20
    return int(min(max(cap * 3 // 4, 32 << 20), 100 << 20))


def _pick_batch_tile(batch, seq, d_model, h, hp, in_bytes, vmem_limit_bytes):
    """Largest batch tile that divides `batch`, is a multiple of 8 (sublanes),
    fits the VMEM budget (weights + double-buffered x/out tiles + in-kernel
    temporaries), and leaves >= 2 grid steps so v7x megacore can shard."""
    # Bytes independent of the batch tile: weight/bias blocks.  The pipeline
    # double-buffers every input block by default, so count them twice.
    weight_bytes = 2 * ((d_model * h + seq * h * hp) * in_bytes + (h + hp) * 4)
    headroom = 4 << 20
    budget = max(vmem_limit_bytes - weight_bytes - headroom, vmem_limit_bytes // 8)
    # Per-batch-row bytes: double-buffered x tile, double-buffered out tile,
    # plus in-kernel temporaries (f32 logits/log-softmax, bf16 flatten copy,
    # f32 decision accumulator / exp).
    per_row = (2 * seq * d_model * in_bytes        # x tile (2 buffers)
               + 2 * hp * 4                        # out tile (2 buffers)
               + 2 * seq * h * 4                   # y / logp (f32)
               + seq * h * in_bytes                # flattened matmul operand
               + 2 * hp * 4)                       # acc / exp (f32)
    cap = min(batch, max(1, budget // per_row))
    if batch >= 16:
        cap = min(cap, batch // 2)                 # >= 2 grid steps (v7x: 2 TCs)
    candidates = [t for t in range(8, cap + 1, 8) if batch % t == 0]
    if candidates:
        return max(candidates)
    return batch   # tiny/odd batches: one full-dim block (satisfies tiling rule)


def _classifier_flat_kernel(x_ref, w1_ref, b1_ref, w2_ref, b2_ref, o_ref):
    """Fused linear -> log_softmax -> flatten -> decision linear -> softmax,
    expressed as TWO large MXU contractions per batch tile.

    x_ref : (TB, S, D)   matmul dtype (bf16 by default)
    w1_ref: (D, H)       matmul dtype
    b1_ref: (1, H)       f32
    w2_ref: (S*H, Hp)    matmul dtype  (decision weight, output dim lane-padded)
    b2_ref: (1, Hp)      f32           (pad lanes hold -1e30)
    o_ref : (TB, Hp)     f32           (lane-dense store; pad lanes come out 0)
    """
    tb, seq, d = x_ref.shape
    h = w1_ref.shape[1]

    # Layer 1 as ONE (TB*S, D) @ (D, H) matmul: fills the MXU M dimension and
    # replaces S tiny matmuls with a single issue/drain sequence.  The reshape
    # only merges leading dims (layout-free when S % 8 == 0).
    x2d = x_ref[...].reshape(tb * seq, d)
    y = jnp.dot(x2d, w1_ref[...], preferred_element_type=jnp.float32)
    y = y + b1_ref[...]                                          # (TB*S, H) f32

    # One vectorized log_softmax pass over all TB*S rows (f32 math).
    m = jnp.max(y, axis=-1, keepdims=True)
    z = y - m
    logp = z - jnp.log(jnp.sum(jnp.exp(z), axis=-1, keepdims=True))

    # torch.flatten(start_dim=1): (TB*S, H) -> (TB, S*H), s-major / h-minor,
    # then ONE decision matmul with contraction depth K = S*H instead of S
    # separate K=H matmuls (no padding of the contraction dim).
    f = logp.reshape(tb, seq * h).astype(w2_ref.dtype)
    acc = jnp.dot(f, w2_ref[...], preferred_element_type=jnp.float32)
    acc = acc + b2_ref[...]                                      # (TB, Hp) f32

    # Final softmax over the lane-padded class dim.  Pad lanes carry a -1e30
    # bias and zero weights, so exp(...) underflows to exactly 0 and the real
    # lanes normalize as in the unpadded softmax.  One reciprocal per row
    # (EUP) + a VPU multiply instead of a full (TB, Hp) divide.
    m2 = jnp.max(acc, axis=-1, keepdims=True)
    e = jnp.exp(acc - m2)
    inv = pl.reciprocal(jnp.sum(e, axis=-1, keepdims=True))
    o_ref[...] = (e * inv).astype(o_ref.dtype)


def _classifier_loop_kernel(x_ref, w1_ref, b1_ref, w2_ref, b2_ref, o_ref):
    """Fallback kernel (previously validated form): per-sequence-step
    accumulation, no minor-dim reshape required.  Same math as the flat
    kernel.  w2_ref here is (S, H, Hp)."""
    tb, seq, _ = x_ref.shape
    h = w1_ref.shape[1]
    hp = o_ref.shape[1]

    w1 = w1_ref[...]
    b1 = jnp.broadcast_to(b1_ref[...], (tb, h))       # hoisted out of the loop
    acc = jnp.broadcast_to(b2_ref[...], (tb, hp))
    # TODO(synk): for very large S this unrolled loop should become an
    # 'arbitrary' grid axis (or lax.fori_loop) with a VMEM scratch accumulator.
    for s in range(seq):
        y = jnp.dot(x_ref[:, s, :], w1, preferred_element_type=jnp.float32) + b1
        m = jnp.max(y, axis=-1, keepdims=True)
        z = y - m
        logp = z - jnp.log(jnp.sum(jnp.exp(z), axis=-1, keepdims=True))
        acc = acc + jnp.dot(logp.astype(w2_ref.dtype), w2_ref[s],
                            preferred_element_type=jnp.float32)
    m2 = jnp.max(acc, axis=-1, keepdims=True)
    e = jnp.exp(acc - m2)
    inv = pl.reciprocal(jnp.sum(e, axis=-1, keepdims=True))
    o_ref[...] = (e * inv).astype(o_ref.dtype)


def classifier_forward(x, w1, b1, w2, b2, *, batch_tile=None,
                       matmul_dtype=jnp.bfloat16, decision_mode="flat"):
    """Pallas forward pass matching Classifier.forward.

    x  : (B, S, D) f32   input, features last (same as nn.Linear input)
    w1 : (D, H)          linear weight, stored (in, out)  [transpose of torch]
    b1 : (1, H)          linear bias
    w2 : (S*H, H)        decision weight, stored (in, out)
    b2 : (1, H)          decision bias
    returns (B, H) softmax probabilities (f32).
    """
    B, S, D = x.shape
    H = w1.shape[1]
    assert w2.shape == (S * H, H) and b1.shape == (1, H) and b2.shape == (1, H)

    Hp = _round_up(H, 128)                         # lane-dense output width
    in_bytes = jnp.dtype(matmul_dtype).itemsize
    vmem_limit = _vmem_limit_bytes()
    TB = batch_tile if batch_tile is not None else _pick_batch_tile(
        B, S, D, H, Hp, in_bytes, vmem_limit)
    assert B % TB == 0, (B, TB)

    # bf16 matmul operands (f32 accumulate inside the kernel); biases stay f32.
    xq = x.astype(matmul_dtype)
    w1q = w1.astype(matmul_dtype)
    b1f = b1.astype(jnp.float32)
    b2p = jnp.pad(b2.astype(jnp.float32), ((0, 0), (0, Hp - H)),
                  constant_values=-1e30)           # pad lanes -> softmax prob 0

    if decision_mode == "flat":
        # Keep w2 flat (S*H, H); only lane-pad the OUTPUT dim (never the
        # contraction dim) so the kernel does one (TB, S*H) @ (S*H, Hp) matmul.
        w2p = jnp.pad(w2.astype(matmul_dtype), ((0, 0), (0, Hp - H)))
        kernel = _classifier_flat_kernel
        w2_spec = pl.BlockSpec((S * H, Hp), lambda i: (0, 0))
    else:
        # Fallback layout for the per-step kernel.
        w2p = jnp.pad(w2.reshape(S, H, H).astype(matmul_dtype),
                      ((0, 0), (0, 0), (0, Hp - H)))
        kernel = _classifier_loop_kernel
        w2_spec = pl.BlockSpec((S, H, Hp), lambda i: (0, 0, 0))

    out_padded = pl.pallas_call(
        kernel,
        out_shape=jax.ShapeDtypeStruct((B, Hp), jnp.float32),
        grid=(B // TB,),
        in_specs=[
            pl.BlockSpec((TB, S, D), lambda i: (i, 0, 0)),   # x, tiled over batch
            pl.BlockSpec((D, H), lambda i: (0, 0)),          # w1 (constant block)
            pl.BlockSpec((1, H), lambda i: (0, 0)),          # b1
            w2_spec,                                         # w2 (constant block)
            pl.BlockSpec((1, Hp), lambda i: (0, 0)),         # b2 (padded)
        ],
        out_specs=pl.BlockSpec((TB, Hp), lambda i: (i, 0)),  # lane-dense store
        compiler_params=pltpu.CompilerParams(
            dimension_semantics=("parallel",),               # megacore on v7x
            vmem_limit_bytes=vmem_limit),                    # generation-aware
    )(xq, w1q, b1f, w2p, b2p)

    return out_padded[:, :H]                                 # drop pad lanes


def _reference_forward(x, w1, b1, w2, b2, matmul_dtype=jnp.bfloat16):
    """Pure-JAX reference mirroring the PyTorch module (and the kernel's
    bf16-input / f32-accumulate matmul precision)."""
    f32 = jnp.float32
    xq = x.astype(matmul_dtype).astype(f32)
    w1q = w1.astype(matmul_dtype).astype(f32)
    y = jnp.einsum('bsd,dh->bsh', xq, w1q) + b1.astype(f32)[0]
    logp = jax.nn.log_softmax(y, axis=-1)
    f = logp.reshape(x.shape[0], -1).astype(matmul_dtype).astype(f32)
    w2q = w2.astype(matmul_dtype).astype(f32)
    logits = f @ w2q + b2.astype(f32)[0]
    return jax.nn.softmax(logits, axis=-1)


if __name__ == "__main__":
    # Small, shape-consistent config: d_model=32, n_hidden=4, batch=16, seq=8.
    # (n_class only toggles bias=True in the original nn.LazyLinear(n_hidden,
    # n_class), so the decision layer maps S*n_hidden -> n_hidden.)
    B, S, D, H = 16, 8, 32, 4

    key = jax.random.PRNGKey(0)
    kx, k1, k2, k3, k4 = jax.random.split(key, 5)

    x = jax.random.normal(kx, (B, S, D), dtype=jnp.float32)
    w1 = jax.random.uniform(k1, (D, H), jnp.float32, -1.0, 1.0) / jnp.sqrt(D)
    b1 = jax.random.uniform(k2, (1, H), jnp.float32, -1.0, 1.0) / jnp.sqrt(D)
    w2 = jax.random.uniform(k3, (S * H, H), jnp.float32, -1.0, 1.0) / jnp.sqrt(S * H)
    b2 = jax.random.uniform(k4, (1, H), jnp.float32, -1.0, 1.0) / jnp.sqrt(S * H)

    # Auto tile picker gives TB=8 here -> 2 grid steps, so the pipelined /
    # 'parallel' path is actually exercised even at toy size.
    fwd = jax.jit(classifier_forward,
                  static_argnames=("batch_tile", "matmul_dtype", "decision_mode"))
    try:
        out = jax.block_until_ready(fwd(x, w1, b1, w2, b2))
    except Exception:
        # Older Mosaic versions may not lower the in-kernel minor-dim flatten;
        # the per-step fallback kernel computes the identical result.
        out = jax.block_until_ready(fwd(x, w1, b1, w2, b2, decision_mode="loop"))

    ref = _reference_forward(x, w1, b1, w2, b2)
    assert out.shape == (B, H)
    err = float(jnp.max(jnp.abs(out - ref)))
    assert jnp.allclose(out, ref, atol=2e-3, rtol=2e-3), f"max abs err {err}"
    assert jnp.allclose(jnp.sum(out, axis=-1), 1.0, atol=1e-5)

    print("KERNEL_OK")
</pallas_src>

<mosaic_0001>
module attributes {stable_mosaic.version = 11 : i64} {
  func.func @_classifier_flat_kernel(%arg0: i32, %arg1: memref<8x8x32xbf16, #tpu.memory_space<vmem>>, %arg2: memref<32x4xbf16, #tpu.memory_space<vmem>>, %arg3: memref<1x4xf32, #tpu.memory_space<vmem>>, %arg4: memref<32x128xbf16, #tpu.memory_space<vmem>>, %arg5: memref<1x128xf32, #tpu.memory_space<vmem>>, %arg6: memref<8x128xf32, #tpu.memory_space<vmem>>) attributes {dimension_semantics = [#tpu.dimension_semantics<parallel>], iteration_bounds = array<i64: 2>, scalar_prefetch = 0 : i64, scratch_operands = 0 : i64, tpu.core_type = #tpu.core_type<tc>, window_params = [{transform_indices = @transform_0, window_bounds = array<i64: 8, 8, 32>}, {pipeline_mode = #tpu.pipeline_mode<synchronous>, transform_indices = @transform_1, window_bounds = array<i64: 32, 4>}, {pipeline_mode = #tpu.pipeline_mode<synchronous>, transform_indices = @transform_2, window_bounds = array<i64: 1, 4>}, {pipeline_mode = #tpu.pipeline_mode<synchronous>, transform_indices = @transform_3, window_bounds = array<i64: 32, 128>}, {pipeline_mode = #tpu.pipeline_mode<synchronous>, transform_indices = @transform_4, window_bounds = array<i64: 1, 128>}, {transform_indices = @transform_5, window_bounds = array<i64: 8, 128>}]} {
    %c0 = arith.constant 0 : index
    %c0_0 = arith.constant 0 : index
    %c0_1 = arith.constant 0 : index
    %0 = vector.load %arg1[%c0, %c0_0, %c0_1] : memref<8x8x32xbf16, #tpu.memory_space<vmem>>, vector<8x8x32xbf16>
    %1 = vector.shape_cast %0 : vector<8x8x32xbf16> to vector<64x32xbf16>
    %c0_2 = arith.constant 0 : index
    %c0_3 = arith.constant 0 : index
    %2 = vector.load %arg2[%c0_2, %c0_3] : memref<32x4xbf16, #tpu.memory_space<vmem>>, vector<32x4xbf16>
    %cst = arith.constant dense<0.000000e+00> : vector<64x4xf32>
    %3 = tpu.matmul %1, %2, %cst {dimension_numbers = #tpu.dot_dimension_numbers<[1], [0], [0], [1], [0, 0, 1, 1], [], []>} : vector<64x32xbf16>, vector<32x4xbf16>, vector<64x4xf32> -> vector<64x4xf32>
    %c0_4 = arith.constant 0 : index
    %c0_5 = arith.constant 0 : index
    %4 = vector.load %arg3[%c0_4, %c0_5] : memref<1x4xf32, #tpu.memory_space<vmem>>, vector<1x4xf32>
    %5 = vector.broadcast %4 : vector<1x4xf32> to vector<64x4xf32>
    %6 = arith.addf %3, %5 : vector<64x4xf32>
    %cst_6 = arith.constant dense<0xFF800000> : vector<64xf32>
    %7 = vector.multi_reduction <maximumf>, %6, %cst_6 [1] : vector<64x4xf32> to vector<64xf32>
    %8 = vector.shape_cast %7 : vector<64xf32> to vector<64x1xf32>
    %9 = vector.broadcast %8 : vector<64x1xf32> to vector<64x4xf32>
    %10 = arith.subf %6, %9 : vector<64x4xf32>
    %11 = math.exp %10 : vector<64x4xf32>
    %cst_7 = arith.constant dense<0.000000e+00> : vector<64xf32>
    %12 = vector.multi_reduction <add>, %11, %cst_7 [1] : vector<64x4xf32> to vector<64xf32>
    %13 = vector.shape_cast %12 : vector<64xf32> to vector<64x1xf32>
    %14 = math.log %13 : vector<64x1xf32>
    %15 = vector.broadcast %14 : vector<64x1xf32> to vector<64x4xf32>
    %16 = arith.subf %10, %15 : vector<64x4xf32>
    %17 = vector.shape_cast %16 : vector<64x4xf32> to vector<8x32xf32>
    %18 = arith.truncf %17 : vector<8x32xf32> to vector<8x32xbf16>
    %c0_8 = arith.constant 0 : index
    %c0_9 = arith.constant 0 : index
    %19 = vector.load %arg4[%c0_8, %c0_9] : memref<32x128xbf16, #tpu.memory_space<vmem>>, vector<32x128xbf16>
    %cst_10 = arith.constant dense<0.000000e+00> : vector<8x128xf32>
    %20 = tpu.matmul %18, %19, %cst_10 {dimension_numbers = #tpu.dot_dimension_numbers<[1], [0], [0], [1], [0, 0, 1, 1], [], []>} : vector<8x32xbf16>, vector<32x128xbf16>, vector<8x128xf32> -> vector<8x128xf32>
    %c0_11 = arith.constant 0 : index
    %c0_12 = arith.constant 0 : index
    %21 = vector.load %arg5[%c0_11, %c0_12] : memref<1x128xf32, #tpu.memory_space<vmem>>, vector<1x128xf32>
    %22 = vector.broadcast %21 : vector<1x128xf32> to vector<8x128xf32>
    %23 = arith.addf %20, %22 : vector<8x128xf32>
    %cst_13 = arith.constant dense<0xFF800000> : vector<8xf32>
    %24 = vector.multi_reduction <maximumf>, %23, %cst_13 [1] : vector<8x128xf32> to vector<8xf32>
    %25 = vector.shape_cast %24 : vector<8xf32> to vector<8x1xf32>
    %26 = vector.broadcast %25 : vector<8x1xf32> to vector<8x128xf32>
    %27 = arith.subf %23, %26 : vector<8x128xf32>
    %28 = math.exp %27 : vector<8x128xf32>
    %cst_14 = arith.constant dense<0.000000e+00> : vector<8xf32>
    %29 = vector.multi_reduction <add>, %28, %cst_14 [1] : vector<8x128xf32> to vector<8xf32>
    %30 = vector.shape_cast %29 : vector<8xf32> to vector<8x1xf32>
    %31 = tpu.reciprocal %30 : vector<8x1xf32> -> vector<8x1xf32>
    %32 = vector.broadcast %31 : vector<8x1xf32> to vector<8x128xf32>
    %33 = arith.mulf %28, %32 : vector<8x128xf32>
    %c0_15 = arith.constant 0 : index
    %c0_16 = arith.constant 0 : index
    %34 = vector.load %arg6[%c0_15, %c0_16] : memref<8x128xf32, #tpu.memory_space<vmem>>, vector<8x128xf32>
    tpu.vector_store %arg6[%c0_15, %c0_16], %33 {strides = array<i32>} : memref<8x128xf32, #tpu.memory_space<vmem>>, vector<8x128xf32>,
    return
  }
  func.func @transform_0(%arg0: i32) -> (i32, i32, i32) {
    %c0_i32 = arith.constant 0 : i32
    %c0_i32_0 = arith.constant 0 : i32
    %c0_i32_1 = arith.constant 0 : i32
    return %arg0, %c0_i32, %c0_i32_0 : i32, i32, i32
  }
  func.func @transform_1(%arg0: i32) -> (i32, i32) {
    %c0_i32 = arith.constant 0 : i32
    %c0_i32_0 = arith.constant 0 : i32
    %c0_i32_1 = arith.constant 0 : i32
    return %c0_i32, %c0_i32_0 : i32, i32
  }
  func.func @transform_2(%arg0: i32) -> (i32, i32) {
    %c0_i32 = arith.constant 0 : i32
    %c0_i32_0 = arith.constant 0 : i32
    %c0_i32_1 = arith.constant 0 : i32
    return %c0_i32, %c0_i32_0 : i32, i32
  }
  func.func @transform_3(%arg0: i32) -> (i32, i32) {
    %c0_i32 = arith.constant 0 : i32
    %c0_i32_0 = arith.constant 0 : i32
    %c0_i32_1 = arith.constant 0 : i32
    return %c0_i32, %c0_i32_0 : i32, i32
  }
  func.func @transform_4(%arg0: i32) -> (i32, i32) {
    %c0_i32 = arith.constant 0 : i32
    %c0_i32_0 = arith.constant 0 : i32
    %c0_i32_1 = arith.constant 0 : i32
    return %c0_i32, %c0_i32_0 : i32, i32
  }
  func.func @transform_5(%arg0: i32) -> (i32, i32) {
    %c0_i32 = arith.constant 0 : i32
    %c0_i32_0 = arith.constant 0 : i32
    return %arg0, %c0_i32 : i32, i32
  }
}

module attributes {stable_mosaic.version = 11 : i64} {
  func.func @_classifier_loop_kernel(%arg0: i32, %arg1: memref<8x8x32xbf16, #tpu.memory_space<vmem>>, %arg2: memref<32x4xbf16, #tpu.memory_space<vmem>>, %arg3: memref<1x4xf32, #tpu.memory_space<vmem>>, %arg4: memref<8x4x128xbf16, #tpu.memory_space<vmem>>, %arg5: memref<1x128xf32, #tpu.memory_space<vmem>>, %arg6: memref<8x128xf32, #tpu.memory_space<vmem>>) attributes {dimension_semantics = [#tpu.dimension_semantics<parallel>], iteration_bounds = array<i64: 2>, scalar_prefetch = 0 : i64, scratch_operands = 0 : i64, tpu.core_type = #tpu.core_type<tc>, window_params = [{transform_indices = @transform_0, window_bounds = array<i64: 8, 8, 32>}, {pipeline_mode = #tpu.pipeline_mode<synchronous>, transform_indices = @transform_1, window_bounds = array<i64: 32, 4>}, {pipeline_mode = #tpu.pipeline_mode<synchronous>, transform_indices = @transform_2, window_bounds = array<i64: 1, 4>}, {pipeline_mode = #tpu.pipeline_mode<synchronous>, transform_indices = @transform_3, window_bounds = array<i64: 8, 4, 128>}, {pipeline_mode = #tpu.pipeline_mode<synchronous>, transform_indices = @transform_4, window_bounds = array<i64: 1, 128>}, {transform_indices = @transform_5, window_bounds = array<i64: 8, 128>}]} {
    %c0 = arith.constant 0 : index
    %c0_0 = arith.constant 0 : index
    %0 = vector.load %arg2[%c0, %c0_0] : memref<32x4xbf16, #tpu.memory_space<vmem>>, vector<32x4xbf16>
    %c0_1 = arith.constant 0 : index
    %c0_2 = arith.constant 0 : index
    %1 = vector.load %arg3[%c0_1, %c0_2] : memref<1x4xf32, #tpu.memory_space<vmem>>, vector<1x4xf32>
    %2 = vector.shape_cast %1 : vector<1x4xf32> to vector<1x4xf32>
    %3 = vector.broadcast %2 : vector<1x4xf32> to vector<8x4xf32>
    %c0_3 = arith.constant 0 : index
    %c0_4 = arith.constant 0 : index
    %4 = vector.load %arg5[%c0_3, %c0_4] : memref<1x128xf32, #tpu.memory_space<vmem>>, vector<1x128xf32>
    %5 = vector.shape_cast %4 : vector<1x128xf32> to vector<1x128xf32>
    %6 = vector.broadcast %5 : vector<1x128xf32> to vector<8x128xf32>
    %c0_5 = arith.constant 0 : index
    %c0_6 = arith.constant 0 : index
    %c0_7 = arith.constant 0 : index
    %7 = vector.load %arg1[%c0_5, %c0_6, %c0_7] : memref<8x8x32xbf16, #tpu.memory_space<vmem>>, vector<8x1x32xbf16>
    %8 = vector.shape_cast %7 : vector<8x1x32xbf16> to vector<8x32xbf16>
    %cst = arith.constant dense<0.000000e+00> : vector<8x4xf32>
    %9 = tpu.matmul %8, %0, %cst {dimension_numbers = #tpu.dot_dimension_numbers<[1], [0], [0], [1], [0, 0, 1, 1], [], []>} : vector<8x32xbf16>, vector<32x4xbf16>, vector<8x4xf32> -> vector<8x4xf32>
    %10 = arith.addf %9, %3 : vector<8x4xf32>
    %cst_8 = arith.constant dense<0xFF800000> : vector<8xf32>
    %11 = vector.multi_reduction <maximumf>, %10, %cst_8 [1] : vector<8x4xf32> to vector<8xf32>
    %12 = vector.shape_cast %11 : vector<8xf32> to vector<8x1xf32>
    %13 = vector.broadcast %12 : vector<8x1xf32> to vector<8x4xf32>
    %14 = arith.subf %10, %13 : vector<8x4xf32>
    %15 = math.exp %14 : vector<8x4xf32>
    %cst_9 = arith.constant dense<0.000000e+00> : vector<8xf32>
    %16 = vector.multi_reduction <add>, %15, %cst_9 [1] : vector<8x4xf32> to vector<8xf32>
    %17 = vector.shape_cast %16 : vector<8xf32> to vector<8x1xf32>
    %18 = math.log %17 : vector<8x1xf32>
    %19 = vector.broadcast %18 : vector<8x1xf32> to vector<8x4xf32>
    %20 = arith.subf %14, %19 : vector<8x4xf32>
    %21 = arith.truncf %20 : vector<8x4xf32> to vector<8x4xbf16>
    %c0_10 = arith.constant 0 : index
    %c0_11 = arith.constant 0 : index
    %c0_12 = arith.constant 0 : index
    %22 = vector.load %arg4[%c0_10, %c0_11, %c0_12] : memref<8x4x128xbf16, #tpu.memory_space<vmem>>, vector<1x4x128xbf16>
    %23 = vector.shape_cast %22 : vector<1x4x128xbf16> to vector<4x128xbf16>
    %cst_13 = arith.constant dense<0.000000e+00> : vector<8x128xf32>
    %24 = tpu.matmul %21, %23, %cst_13 {dimension_numbers = #tpu.dot_dimension_numbers<[1], [0], [0], [1], [0, 0, 1, 1], [], []>} : vector<8x4xbf16>, vector<4x128xbf16>, vector<8x128xf32> -> vector<8x128xf32>
    %25 = arith.addf %6, %24 : vector<8x128xf32>
    %c0_14 = arith.constant 0 : index
    %c1 = arith.constant 1 : index
    %c0_15 = arith.constant 0 : index
    %26 = vector.load %arg1[%c0_14, %c1, %c0_15] : memref<8x8x32xbf16, #tpu.memory_space<vmem>>, vector<8x1x32xbf16>
    %27 = vector.shape_cast %26 : vector<8x1x32xbf16> to vector<8x32xbf16>
    %cst_16 = arith.constant dense<0.000000e+00> : vector<8x4xf32>
    %28 = tpu.matmul %27, %0, %cst_16 {dimension_numbers = #tpu.dot_dimension_numbers<[1], [0], [0], [1], [0, 0, 1, 1], [], []>} : vector<8x32xbf16>, vector<32x4xbf16>, vector<8x4xf32> -> vector<8x4xf32>
    %29 = arith.addf %28, %3 : vector<8x4xf32>
    %cst_17 = arith.constant dense<0xFF800000> : vector<8xf32>
    %30 = vector.multi_reduction <maximumf>, %29, %cst_17 [1] : vector<8x4xf32> to vector<8xf32>
    %31 = vector.shape_cast %30 : vector<8xf32> to vector<8x1xf32>
    %32 = vector.broadcast %31 : vector<8x1xf32> to vector<8x4xf32>
    %33 = arith.subf %29, %32 : vector<8x4xf32>
    %34 = math.exp %33 : vector<8x4xf32>
    %cst_18 = arith.constant dense<0.000000e+00> : vector<8xf32>
    %35 = vector.multi_reduction <add>, %34, %cst_18 [1] : vector<8x4xf32> to vector<8xf32>
    %36 = vector.shape_cast %35 : vector<8xf32> to vector<8x1xf32>
    %37 = math.log %36 : vector<8x1xf32>
    %38 = vector.broadcast %37 : vector<8x1xf32> to vector<8x4xf32>
    %39 = arith.subf %33, %38 : vector<8x4xf32>
    %40 = arith.truncf %39 : vector<8x4xf32> to vector<8x4xbf16>
    %c1_19 = arith.constant 1 : index
    %c0_20 = arith.constant 0 : index
    %c0_21 = arith.constant 0 : index
    %41 = vector.load %arg4[%c1_19, %c0_20, %c0_21] : memref<8x4x128xbf16, #tpu.memory_space<vmem>>, vector<1x4x128xbf16>
    %42 = vector.shape_cast %41 : vector<1x4x128xbf16> to vector<4x128xbf16>
    %cst_22 = arith.constant dense<0.000000e+00> : vector<8x128xf32>
    %43 = tpu.matmul %40, %42, %cst_22 {dimension_numbers = #tpu.dot_dimension_numbers<[1], [0], [0], [1], [0, 0, 1, 1], [], []>} : vector<8x4xbf16>, vector<4x128xbf16>, vector<8x128xf32> -> vector<8x128xf32>
    %44 = arith.addf %25, %43 : vector<8x128xf32>
    %c0_23 = arith.constant 0 : index
    %c2 = arith.constant 2 : index
    %c0_24 = arith.constant 0 : index
    %45 = vector.load %arg1[%c0_23, %c2, %c0_24] : memref<8x8x32xbf16, #tpu.memory_space<vmem>>, vector<8x1x32xbf16>
    %46 = vector.shape_cast %45 : vector<8x1x32xbf16> to vector<8x32xbf16>
    %cst_25 = arith.constant dense<0.000000e+00> : vector<8x4xf32>
    %47 = tpu.matmul %46, %0, %cst_25 {dimension_numbers = #tpu.dot_dimension_numbers<[1], [0], [0], [1], [0, 0, 1, 1], [], []>} : vector<8x32xbf16>, vector<32x4xbf16>, vector<8x4xf32> -> vector<8x4xf32>
    %48 = arith.addf %47, %3 : vector<8x4xf32>
    %cst_26 = arith.constant dense<0xFF800000> : vector<8xf32>
    %49 = vector.multi_reduction <maximumf>, %48, %cst_26 [1] : vector<8x4xf32> to vector<8xf32>
    %50 = vector.shape_cast %49 : vector<8xf32> to vector<8x1xf32>
    %51 = vector.broadcast %50 : vector<8x1xf32> to vector<8x4xf32>
    %52 = arith.subf %48, %51 : vector<8x4xf32>
    %53 = math.exp %52 : vector<8x4xf32>
    %cst_27 = arith.constant dense<0.000000e+00> : vector<8xf32>
    %54 = vector.multi_reduction <add>, %53, %cst_27 [1] : vector<8x4xf32> to vector<8xf32>
    %55 = vector.shape_cast %54 : vector<8xf32> to vector<8x1xf32>
    %56 = math.log %55 : vector<8x1xf32>
    %57 = vector.broadcast %56 : vector<8x1xf32> to vector<8x4xf32>
    %58 = arith.subf %52, %57 : vector<8x4xf32>
    %59 = arith.truncf %58 : vector<8x4xf32> to vector<8x4xbf16>
    %c2_28 = arith.constant 2 : index
    %c0_29 = arith.constant 0 : index
    %c0_30 = arith.constant 0 : index
    %60 = vector.load %arg4[%c2_28, %c0_29, %c0_30] : memref<8x4x128xbf16, #tpu.memory_space<vmem>>, vector<1x4x128xbf16>
    %61 = vector.shape_cast %60 : vector<1x4x128xbf16> to vector<4x128xbf16>
    %cst_31 = arith.constant dense<0.000000e+00> : vector<8x128xf32>
    %62 = tpu.matmul %59, %61, %cst_31 {dimension_numbers = #tpu.dot_dimension_numbers<[1], [0], [0], [1], [0, 0, 1, 1], [], []>} : vector<8x4xbf16>, vector<4x128xbf16>, vector<8x128xf32> -> vector<8x128xf32>
    %63 = arith.addf %44, %62 : vector<8x128xf32>
    %c0_32 = arith.constant 0 : index
    %c3 = arith.constant 3 : index
    %c0_33 = arith.constant 0 : index
    %64 = vector.load %arg1[%c0_32, %c3, %c0_33] : memref<8x8x32xbf16, #tpu.memory_space<vmem>>, vector<8x1x32xbf16>
    %65 = vector.shape_cast %64 : vector<8x1x32xbf16> to vector<8x32xbf16>
    %cst_34 = arith.constant dense<0.000000e+00> : vector<8x4xf32>
    %66 = tpu.matmul %65, %0, %cst_34 {dimension_numbers = #tpu.dot_dimension_numbers<[1], [0], [0], [1], [0, 0, 1, 1], [], []>} : vector<8x32xbf16>, vector<32x4xbf16>, vector<8x4xf32> -> vector<8x4xf32>
    %67 = arith.addf %66, %3 : vector<8x4xf32>
    %cst_35 = arith.constant dense<0xFF800000> : vector<8xf32>
    %68 = vector.multi_reduction <maximumf>, %67, %cst_35 [1] : vector<8x4xf32> to vector<8xf32>
    %69 = vector.shape_cast %68 : vector<8xf32> to vector<8x1xf32>
    %70 = vector.broadcast %69 : vector<8x1xf32> to vector<8x4xf32>
    %71 = arith.subf %67, %70 : vector<8x4xf32>
    %72 = math.exp %71 : vector<8x4xf32>
    %cst_36 = arith.constant dense<0.000000e+00> : vector<8xf32>
    %73 = vector.multi_reduction <add>, %72, %cst_36 [1] : vector<8x4xf32> to vector<8xf32>
    %74 = vector.shape_cast %73 : vector<8xf32> to vector<8x1xf32>
    %75 = math.log %74 : vector<8x1xf32>
    %76 = vector.broadcast %75 : vector<8x1xf32> to vector<8x4xf32>
    %77 = arith.subf %71, %76 : vector<8x4xf32>
    %78 = arith.truncf %77 : vector<8x4xf32> to vector<8x4xbf16>
    %c3_37 = arith.constant 3 : index
    %c0_38 = arith.constant 0 : index
    %c0_39 = arith.constant 0 : index
    %79 = vector.load %arg4[%c3_37, %c0_38, %c0_39] : memref<8x4x128xbf16, #tpu.memory_space<vmem>>, vector<1x4x128xbf16>
    %80 = vector.shape_cast %79 : vector<1x4x128xbf16> to vector<4x128xbf16>
    %cst_40 = arith.constant dense<0.000000e+00> : vector<8x128xf32>
    %81 = tpu.matmul %78, %80, %cst_40 {dimension_numbers = #tpu.dot_dimension_numbers<[1], [0], [0], [1], [0, 0, 1, 1], [], []>} : vector<8x4xbf16>, vector<4x128xbf16>, vector<8x128xf32> -> vector<8x128xf32>
    %82 = arith.addf %63, %81 : vector<8x128xf32>
    %c0_41 = arith.constant 0 : index
    %c4 = arith.constant 4 : index
    %c0_42 = arith.constant 0 : index
    %83 = vector.load %arg1[%c0_41, %c4, %c0_42] : memref<8x8x32xbf16, #tpu.memory_space<vmem>>, vector<8x1x32xbf16>
    %84 = vector.shape_cast %83 : vector<8x1x32xbf16> to vector<8x32xbf16>
    %cst_43 = arith.constant dense<0.000000e+00> : vector<8x4xf32>
    %85 = tpu.matmul %84, %0, %cst_43 {dimension_numbers = #tpu.dot_dimension_numbers<[1], [0], [0], [1], [0, 0, 1, 1], [], []>} : vector<8x32xbf16>, vector<32x4xbf16>, vector<8x4xf32> -> vector<8x4xf32>
    %86 = arith.addf %85, %3 : vector<8x4xf32>
    %cst_44 = arith.constant dense<0xFF800000> : vector<8xf32>
    %87 = vector.multi_reduction <maximumf>, %86, %cst_44 [1] : vector<8x4xf32> to vector<8xf32>
    %88 = vector.shape_cast %87 : vector<8xf32> to vector<8x1xf32>
    %89 = vector.broadcast %88 : vector<8x1xf32> to vector<8x4xf32>
    %90 = arith.subf %86, %89 : vector<8x4xf32>
    %91 = math.exp %90 : vector<8x4xf32>
    %cst_45 = arith.constant dense<0.000000e+00> : vector<8xf32>
    %92 = vector.multi_reduction <add>, %91, %cst_45 [1] : vector<8x4xf32> to vector<8xf32>
    %93 = vector.shape_cast %92 : vector<8xf32> to vector<8x1xf32>
    %94 = math.log %93 : vector<8x1xf32>
    %95 = vector.broadcast %94 : vector<8x1xf32> to vector<8x4xf32>
    %96 = arith.subf %90, %95 : vector<8x4xf32>
    %97 = arith.truncf %96 : vector<8x4xf32> to vector<8x4xbf16>
    %c4_46 = arith.constant 4 : index
    %c0_47 = arith.constant 0 : index
    %c0_48 = arith.constant 0 : index
    %98 = vector.load %arg4[%c4_46, %c0_47, %c0_48] : memref<8x4x128xbf16, #tpu.memory_space<vmem>>, vector<1x4x128xbf16>
    %99 = vector.shape_cast %98 : vector<1x4x128xbf16> to vector<4x128xbf16>
    %cst_49 = arith.constant dense<0.000000e+00> : vector<8x128xf32>
    %100 = tpu.matmul %97, %99, %cst_49 {dimension_numbers = #tpu.dot_dimension_numbers<[1], [0], [0], [1], [0, 0, 1, 1], [], []>} : vector<8x4xbf16>, vector<4x128xbf16>, vector<8x128xf32> -> vector<8x128xf32>
    %101 = arith.addf %82, %100 : vector<8x128xf32>
    %c0_50 = arith.constant 0 : index
    %c5 = arith.constant 5 : index
    %c0_51 = arith.constant 0 : index
    %102 = vector.load %arg1[%c0_50, %c5, %c0_51] : memref<8x8x32xbf16, #tpu.memory_space<vmem>>, vector<8x1x32xbf16>
    %103 = vector.shape_cast %102 : vector<8x1x32xbf16> to vector<8x32xbf16>
    %cst_52 = arith.constant dense<0.000000e+00> : vector<8x4xf32>
    %104 = tpu.matmul %103, %0, %cst_52 {dimension_numbers = #tpu.dot_dimension_numbers<[1], [0], [0], [1], [0, 0, 1, 1], [], []>} : vector<8x32xbf16>, vector<32x4xbf16>, vector<8x4xf32> -> vector<8x4xf32>
    %105 = arith.addf %104, %3 : vector<8x4xf32>
    %cst_53 = arith.constant dense<0xFF800000> : vector<8xf32>
    %106 = vector.multi_reduction <maximumf>, %105, %cst_53 [1] : vector<8x4xf32> to vector<8xf32>
    %107 = vector.shape_cast %106 : vector<8xf32> to vector<8x1xf32>
    %108 = vector.broadcast %107 : vector<8x1xf32> to vector<8x4xf32>
    %109 = arith.subf %105, %108 : vector<8x4xf32>
    %110 = math.exp %109 : vector<8x4xf32>
    %cst_54 = arith.constant dense<0.000000e+00> : vector<8xf32>
    %111 = vector.multi_reduction <add>, %110, %cst_54 [1] : vector<8x4xf32> to vector<8xf32>
    %112 = vector.shape_cast %111 : vector<8xf32> to vector<8x1xf32>
    %113 = math.log %112 : vector<8x1xf32>
    %114 = vector.broadcast %113 : vector<8x1xf32> to vector<8x4xf32>
    %115 = arith.subf %109, %114 : vector<8x4xf32>
    %116 = arith.truncf %115 : vector<8x4xf32> to vector<8x4xbf16>
    %c5_55 = arith.constant 5 : index
    %c0_56 = arith.constant 0 : index
    %c0_57 = arith.constant 0 : index
    %117 = vector.load %arg4[%c5_55, %c0_56, %c0_57] : memref<8x4x128xbf16, #tpu.memory_space<vmem>>, vector<1x4x128xbf16>
    %118 = vector.shape_cast %117 : vector<1x4x128xbf16> to vector<4x128xbf16>
    %cst_58 = arith.constant dense<0.000000e+00> : vector<8x128xf32>
    %119 = tpu.matmul %116, %118, %cst_58 {dimension_numbers = #tpu.dot_dimension_numbers<[1], [0], [0], [1], [0, 0, 1, 1], [], []>} : vector<8x4xbf16>, vector<4x128xbf16>, vector<8x128xf32> -> vector<8x128xf32>
    %120 = arith.addf %101, %119 : vector<8x128xf32>
    %c0_59 = arith.constant 0 : index
    %c6 = arith.constant 6 : index
    %c0_60 = arith.constant 0 : index
    %121 = vector.load %arg1[%c0_59, %c6, %c0_60] : memref<8x8x32xbf16, #tpu.memory_space<vmem>>, vector<8x1x32xbf16>
    %122 = vector.shape_cast %121 : vector<8x1x32xbf16> to vector<8x32xbf16>
    %cst_61 = arith.constant dense<0.000000e+00> : vector<8x4xf32>
    %123 = tpu.matmul %122, %0, %cst_61 {dimension_numbers = #tpu.dot_dimension_numbers<[1], [0], [0], [1], [0, 0, 1, 1], [], []>} : vector<8x32xbf16>, vector<32x4xbf16>, vector<8x4xf32> -> vector<8x4xf32>
    %124 = arith.addf %123, %3 : vector<8x4xf32>
    %cst_62 = arith.constant dense<0xFF800000> : vector<8xf32>
    %125 = vector.multi_reduction <maximumf>, %124, %cst_62 [1] : vector<8x4xf32> to vector<8xf32>
    %126 = vector.shape_cast %125 : vector<8xf32> to vector<8x1xf32>
    %127 = vector.broadcast %126 : vector<8x1xf32> to vector<8x4xf32>
    %128 = arith.subf %124, %127 : vector<8x4xf32>
    %129 = math.exp %128 : vector<8x4xf32>
    %cst_63 = arith.constant dense<0.000000e+00> : vector<8xf32>
    %130 = vector.multi_reduction <add>, %129, %cst_63 [1] : vector<8x4xf32> to vector<8xf32>
    %131 = vector.shape_cast %130 : vector<8xf32> to vector<8x1xf32>
    %132 = math.log %131 : vector<8x1xf32>
    %133 = vector.broadcast %132 : vector<8x1xf32> to vector<8x4xf32>
    %134 = arith.subf %128, %133 : vector<8x4xf32>
    %135 = arith.truncf %134 : vector<8x4xf32> to vector<8x4xbf16>
    %c6_64 = arith.constant 6 : index
    %c0_65 = arith.constant 0 : index
    %c0_66 = arith.constant 0 : index
    %136 = vector.load %arg4[%c6_64, %c0_65, %c0_66] : memref<8x4x128xbf16, #tpu.memory_space<vmem>>, vector<1x4x128xbf16>
    %137 = vector.shape_cast %136 : vector<1x4x128xbf16> to vector<4x128xbf16>
    %cst_67 = arith.constant dense<0.000000e+00> : vector<8x128xf32>
    %138 = tpu.matmul %135, %137, %cst_67 {dimension_numbers = #tpu.dot_dimension_numbers<[1], [0], [0], [1], [0, 0, 1, 1], [], []>} : vector<8x4xbf16>, vector<4x128xbf16>, vector<8x128xf32> -> vector<8x128xf32>
    %139 = arith.addf %120, %138 : vector<8x128xf32>
    %c0_68 = arith.constant 0 : index
    %c7 = arith.constant 7 : index
    %c0_69 = arith.constant 0 : index
    %140 = vector.load %arg1[%c0_68, %c7, %c0_69] : memref<8x8x32xbf16, #tpu.memory_space<vmem>>, vector<8x1x32xbf16>
    %141 = vector.shape_cast %140 : vector<8x1x32xbf16> to vector<8x32xbf16>
    %cst_70 = arith.constant dense<0.000000e+00> : vector<8x4xf32>
    %142 = tpu.matmul %141, %0, %cst_70 {dimension_numbers = #tpu.dot_dimension_numbers<[1], [0], [0], [1], [0, 0, 1, 1], [], []>} : vector<8x32xbf16>, vector<32x4xbf16>, vector<8x4xf32> -> vector<8x4xf32>
    %143 = arith.addf %142, %3 : vector<8x4xf32>
    %cst_71 = arith.constant dense<0xFF800000> : vector<8xf32>
    %144 = vector.multi_reduction <maximumf>, %143, %cst_71 [1] : vector<8x4xf32> to vector<8xf32>
    %145 = vector.shape_cast %144 : vector<8xf32> to vector<8x1xf32>
    %146 = vector.broadcast %145 : vector<8x1xf32> to vector<8x4xf32>
    %147 = arith.subf %143, %146 : vector<8x4xf32>
    %148 = math.exp %147 : vector<8x4xf32>
    %cst_72 = arith.constant dense<0.000000e+00> : vector<8xf32>
    %149 = vector.multi_reduction <add>, %148, %cst_72 [1] : vector<8x4xf32> to vector<8xf32>
    %150 = vector.shape_cast %149 : vector<8xf32> to vector<8x1xf32>
    %151 = math.log %150 : vector<8x1xf32>
    %152 = vector.broadcast %151 : vector<8x1xf32> to vector<8x4xf32>
    %153 = arith.subf %147, %152 : vector<8x4xf32>
    %154 = arith.truncf %153 : vector<8x4xf32> to vector<8x4xbf16>
    %c7_73 = arith.constant 7 : index
    %c0_74 = arith.constant 0 : index
    %c0_75 = arith.constant 0 : index
    %155 = vector.load %arg4[%c7_73, %c0_74, %c0_75] : memref<8x4x128xbf16, #tpu.memory_space<vmem>>, vector<1x4x128xbf16>
    %156 = vector.shape_cast %155 : vector<1x4x128xbf16> to vector<4x128xbf16>
    %cst_76 = arith.constant dense<0.000000e+00> : vector<8x128xf32>
    %157 = tpu.matmul %154, %156, %cst_76 {dimension_numbers = #tpu.dot_dimension_numbers<[1], [0], [0], [1], [0, 0, 1, 1], [], []>} : vector<8x4xbf16>, vector<4x128xbf16>, vector<8x128xf32> -> vector<8x128xf32>
    %158 = arith.addf %139, %157 : vector<8x128xf32>
    %cst_77 = arith.constant dense<0xFF800000> : vector<8xf32>
    %159 = vector.multi_reduction <maximumf>, %158, %cst_77 [1] : vector<8x128xf32> to vector<8xf32>
    %160 = vector.shape_cast %159 : vector<8xf32> to vector<8x1xf32>
    %161 = vector.broadcast %160 : vector<8x1xf32> to vector<8x128xf32>
    %162 = arith.subf %158, %161 : vector<8x128xf32>
    %163 = math.exp %162 : vector<8x128xf32>
    %cst_78 = arith.constant dense<0.000000e+00> : vector<8xf32>
    %164 = vector.multi_reduction <add>, %163, %cst_78 [1] : vector<8x128xf32> to vector<8xf32>
    %165 = vector.shape_cast %164 : vector<8xf32> to vector<8x1xf32>
    %166 = tpu.reciprocal %165 : vector<8x1xf32> -> vector<8x1xf32>
    %167 = vector.broadcast %166 : vector<8x1xf32> to vector<8x128xf32>
    %168 = arith.mulf %163, %167 : vector<8x128xf32>
    %c0_79 = arith.constant 0 : index
    %c0_80 = arith.constant 0 : index
    %169 = vector.load %arg6[%c0_79, %c0_80] : memref<8x128xf32, #tpu.memory_space<vmem>>, vector<8x128xf32>
    tpu.vector_store %arg6[%c0_79, %c0_80], %168 {strides = array<i32>} : memref<8x128xf32, #tpu.memory_space<vmem>>, vector<8x128xf32>,
    return
  }
  func.func @transform_0(%arg0: i32) -> (i32, i32, i32) {
    %c0_i32 = arith.constant 0 : i32
    %c0_i32_0 = arith.constant 0 : i32
    %c0_i32_1 = arith.constant 0 : i32
    return %arg0, %c0_i32, %c0_i32_0 : i32, i32, i32
  }
  func.func @transform_1(%arg0: i32) -> (i32, i32) {
    %c0_i32 = arith.constant 0 : i32
    %c0_i32_0 = arith.constant 0 : i32
    %c0_i32_1 = arith.constant 0 : i32
    return %c0_i32, %c0_i32_0 : i32, i32
  }
  func.func @transform_2(%arg0: i32) -> (i32, i32) {
    %c0_i32 = arith.constant 0 : i32
    %c0_i32_0 = arith.constant 0 : i32
    %c0_i32_1 = arith.constant 0 : i32
    return %c0_i32, %c0_i32_0 : i32, i32
  }
  func.func @transform_3(%arg0: i32) -> (i32, i32, i32) {
    %c0_i32 = arith.constant 0 : i32
    %c0_i32_0 = arith.constant 0 : i32
    %c0_i32_1 = arith.constant 0 : i32
    %c0_i32_2 = arith.constant 0 : i32
    return %c0_i32, %c0_i32_0, %c0_i32_1 : i32, i32, i32
  }
  func.func @transform_4(%arg0: i32) -> (i32, i32) {
    %c0_i32 = arith.constant 0 : i32
    %c0_i32_0 = arith.constant 0 : i32
    %c0_i32_1 = arith.constant 0 : i32
    return %c0_i32, %c0_i32_0 : i32, i32
  }
  func.func @transform_5(%arg0: i32) -> (i32, i32) {
    %c0_i32 = arith.constant 0 : i32
    %c0_i32_0 = arith.constant 0 : i32
    return %arg0, %c0_i32 : i32, i32
  }
}

</mosaic_0001>

<llo_original>
// kernel: classifier_forward.1
$region0: #{classifier_forward.1}
  #allocation0 [shape = 'u32[]', space=smem, size = 0x4, offset = 0x4, fixed_abs, tag = 'smem constant byte address 0x4 - core index']
  #allocation1 [shape = 'u32[144,128]{1,0:T(1,128)}', space=vmem, size = 0x12000, scoped, tag = 'internal scratch']
  %s0 = inlined_call_operand.vmem [shape: bf16[16,8,32], index: 0, kind: input, shape index: {}]
  %s1 = inlined_call_operand.vmem [shape: bf16[32,4], index: 1, kind: input, shape index: {}]
  %s2 = inlined_call_operand.vmem [shape: f32[1,4], index: 2, kind: input, shape index: {}]
  %s3 = inlined_call_operand.vmem [shape: bf16[8,4,128], index: 3, kind: input, shape index: {}]
  %s4 = inlined_call_operand.vmem [shape: f32[1,128], index: 4, kind: input, shape index: {}]
  %s5 = inlined_call_operand.vmem [shape: f32[16,128], index: 5, kind: output, shape index: {}]
  %s6 = sld [smem:[#allocation0]]
  $region53: #{classifier_forward.1} parent=0
    _
  %s8 = ssub.s32 1, %s6
  %s9 = scalar_select 0, %s8, %s6
  loop: start=0, step=1, limit=4
  $region2: #{classifier_forward.1} parent=0 // loop_pre_header
    _
  $region3: #{classifier_forward.1} parent=0 // loop_header
    %s11 = sphi 0, %s15
    %p12 = scmp.ge.s32.totalorder %s11, 4
    %s21 = sphi 0, %s23
    %s24 = sphi 0, %s21
    %s25 = sphi 0, %s24
    %s41 = sphi 0, %s25
    %s45 = sphi 0, %s45
    %s47 = sphi 0, %s45
    %s48 = sphi 0, %s47
    %s62 = sphi 0, %s48
    %s66 = sphi 0, %s66
    %s68 = sphi 0, %s66
    %s69 = sphi 0, %s68
    %s83 = sphi 0, %s69
    %s87 = sphi 0, %s87
    %s89 = sphi 0, %s87
    %s90 = sphi 0, %s89
    %s104 = sphi 0, %s90
    %s108 = sphi 0, %s108
    %s110 = sphi 0, %s108
    %s111 = sphi 0, %s110
    %s125 = sphi 0, %s111
    %s131 = sphi 0, %s133
    %s134 = sphi 0, %s131
    %s135 = sphi 0, %s134
    %s151 = sphi 0, %s135
  $region4: #{classifier_forward.1} parent=0 // loop_header_branch
    %14 = sbr.rel (%p12) target = $region8
  $region5: #{classifier_forward.1} parent=0 // loop_body
    %s16 = ssub.s32 %s11, 1
    %s17 = ssub.s32 %s11, 2
    %s18 = sadd.s32 %s11, 1
    %s19 = ssub.s32 %s11, %s18
    %p20 = scmp.eq.s32.totalorder %s19, 0
    %s22 = sadd.s32 %s21, 1
    %s23 = scalar_select %p20, %s21, %s22
    %p26 = pneg %p20
    %p27 = scmp.eq.s32.totalorder %s11, 1
    %p28 = por %p26, %p27
    %p29 = scmp.ne.s32.totalorder %s21, %s24
    %p30 = scmp.eq.s32.totalorder %s11, 0
    %p31 = por %p29, %p30
    %p32 = scmp.ne.s32.totalorder %s21, %s24
    %p33 = scmp.eq.s32.totalorder %s16, 1
    %p34 = por %p32, %p33
    %p35 = scmp.ne.s32.totalorder %s24, %s25
    %p36 = scmp.eq.s32.totalorder %s16, 0
    %p37 = por %p35, %p36
    %p38 = scmp.ne.s32.totalorder %s24, %s25
    %p39 = scmp.eq.s32.totalorder %s17, 1
    %p40 = por %p38, %p39
    %p42 = scmp.ne.s32.totalorder %s25, %s41
    %p43 = scmp.eq.s32.totalorder %s17, 0
    %p44 = por %p42, %p43
    %s46 = sadd.s32 %s45, 1
    %p49 = scmp.eq.s32.totalorder %s11, 1
    %p50 = scmp.ne.s32.totalorder %s45, %s47
    %p51 = scmp.eq.s32.totalorder %s11, 0
    %p52 = por %p50, %p51
    %p53 = scmp.ne.s32.totalorder %s45, %s47
    %p54 = scmp.eq.s32.totalorder %s16, 1
    %p55 = por %p53, %p54
    %p56 = scmp.ne.s32.totalorder %s47, %s48
    %p57 = scmp.eq.s32.totalorder %s16, 0
    %p58 = por %p56, %p57
    %p59 = scmp.ne.s32.totalorder %s47, %s48
    %p60 = scmp.eq.s32.totalorder %s17, 1
    %p61 = por %p59, %p60
    %p63 = scmp.ne.s32.totalorder %s48, %s62
    %p64 = scmp.eq.s32.totalorder %s17, 0
    %p65 = por %p63, %p64
    %s67 = sadd.s32 %s66, 1
    %p70 = scmp.eq.s32.totalorder %s11, 1
    %p71 = scmp.ne.s32.totalorder %s66, %s68
    %p72 = scmp.eq.s32.totalorder %s11, 0
    %p73 = por %p71, %p72
    %p74 = scmp.ne.s32.totalorder %s66, %s68
    %p75 = scmp.eq.s32.totalorder %s16, 1
    %p76 = por %p74, %p75
    %p77 = scmp.ne.s32.totalorder %s68, %s69
    %p78 = scmp.eq.s32.totalorder %s16, 0
    %p79 = por %p77, %p78
    %p80 = scmp.ne.s32.totalorder %s68, %s69
    %p81 = scmp.eq.s32.totalorder %s17, 1
    %p82 = por %p80, %p81
    %p84 = scmp.ne.s32.totalorder %s69, %s83
    %p85 = scmp.eq.s32.totalorder %s17, 0
    %p86 = por %p84, %p85
    %s88 = sadd.s32 %s87, 1
    %p91 = scmp.eq.s32.totalorder %s11, 1
    %p92 = scmp.ne.s32.totalorder %s87, %s89
    %p93 = scmp.eq.s32.totalorder %s11, 0
    %p94 = por %p92, %p93
    %p95 = scmp.ne.s32.totalorder %s87, %s89
    %p96 = scmp.eq.s32.totalorder %s16, 1
    %p97 = por %p95, %p96
    %p98 = scmp.ne.s32.totalorder %s89, %s90
    %p99 = scmp.eq.s32.totalorder %s16, 0
    %p100 = por %p98, %p99
    %p101 = scmp.ne.s32.totalorder %s89, %s90
    %p102 = scmp.eq.s32.totalorder %s17, 1
    %p103 = por %p101, %p102
    %p105 = scmp.ne.s32.totalorder %s90, %s104
    %p106 = scmp.eq.s32.totalorder %s17, 0
    %p107 = por %p105, %p106
    %s109 = sadd.s32 %s108, 1
    %p112 = scmp.eq.s32.totalorder %s11, 1
    %p113 = scmp.ne.s32.totalorder %s108, %s110
    %p114 = scmp.eq.s32.totalorder %s11, 0
    %p115 = por %p113, %p114
    %p116 = scmp.ne.s32.totalorder %s108, %s110
    %p117 = scmp.eq.s32.totalorder %s16, 1
    %p118 = por %p116, %p117
    %p119 = scmp.ne.s32.totalorder %s110, %s111
    %p120 = scmp.eq.s32.totalorder %s16, 0
    %p121 = por %p119, %p120
    %p122 = scmp.ne.s32.totalorder %s110, %s111
    %p123 = scmp.eq.s32.totalorder %s17, 1
    %p124 = por %p122, %p123
    %p126 = scmp.ne.s32.totalorder %s111, %s125
    %p127 = scmp.eq.s32.totalorder %s17, 0
    %p128 = por %p126, %p127
    %s129 = ssub.s32 %s11, %s18
    %p130 = scmp.eq.s32.totalorder %s129, 0
    %s132 = sadd.s32 %s131, 1
    %s133 = scalar_select %p130, %s131, %s132
    %p136 = pneg %p130
    %p137 = scmp.eq.s32.totalorder %s11, 1
    %p138 = por %p136, %p137
    %p139 = scmp.ne.s32.totalorder %s131, %s134
    %p140 = scmp.eq.s32.totalorder %s11, 0
    %p141 = por %p139, %p140
    %p142 = scmp.ne.s32.totalorder %s131, %s134
    %p143 = scmp.eq.s32.totalorder %s16, 1
    %p144 = por %p142, %p143
    %p145 = scmp.ne.s32.totalorder %s134, %s135
    %p146 = scmp.eq.s32.totalorder %s16, 0
    %p147 = por %p145, %p146
    %p148 = scmp.ne.s32.totalorder %s134, %s135
    %p149 = scmp.eq.s32.totalorder %s17, 1
    %p150 = por %p148, %p149
    %p152 = scmp.ne.s32.totalorder %s135, %s151
    %p153 = scmp.eq.s32.totalorder %s17, 0
    %p154 = por %p152, %p153
    %p155 = scmp.le.s32.totalorder 1, %s11
    %p156 = scmp.lt.s32.totalorder %s11, 3
    %p157 = pnand %p155, %p156
    %p158 = pneg %p157
    // Predicated region
    $region9: #{classifier_forward.1} parent=5 // pred_check
      _
    $region10: #{classifier_forward.1} parent=5 // pred_check_branch
      %160 = sbr.rel (%p157) target = $region12
    $region11: #{classifier_forward.1} parent=5 // pred_region
      %s161 = ssub.s32 %s11, 1
      // Predicated region
      $region13: #{classifier_forward.1} parent=11 // pred_check
        %p162 = pneg %p58
      $region14: #{classifier_forward.1} parent=11 // pred_check_branch
        %164 = sbr.rel (%p162) target = $region16
      $region15: #{classifier_forward.1} parent=11 // pred_region
        _
      $region16: #{classifier_forward.1} parent=11 // pred_fallthru
        _
      // Predicated region
      $region17: #{classifier_forward.1} parent=11 // pred_check
        %p165 = pneg %p79
      $region18: #{classifier_forward.1} parent=11 // pred_check_branch
        %167 = sbr.rel (%p165) target = $region20
      $region19: #{classifier_forward.1} parent=11 // pred_region
        _
      $region20: #{classifier_forward.1} parent=11 // pred_fallthru
        _
      // Predicated region
      $region21: #{classifier_forward.1} parent=11 // pred_check
        %p168 = pneg %p100
      $region22: #{classifier_forward.1} parent=11 // pred_check_branch
        %170 = sbr.rel (%p168) target = $region24
      $region23: #{classifier_forward.1} parent=11 // pred_region
        _
      $region24: #{classifier_forward.1} parent=11 // pred_fallthru
        _
      // Predicated region
      $region25: #{classifier_forward.1} parent=11 // pred_check
        %p171 = pneg %p121
      $region26: #{classifier_forward.1} parent=11 // pred_check_branch
        %173 = sbr.rel (%p171) target = $region28
      $region27: #{classifier_forward.1} parent=11 // pred_region
        _
      $region28: #{classifier_forward.1} parent=11 // pred_fallthru
        _
    $region12: #{classifier_forward.1} parent=5 // pred_fallthru
      _
    %p174 = scmp.lt.s32.totalorder %s11, 2
    // Predicated region
    $region29: #{classifier_forward.1} parent=5 // pred_check
      %p175 = pneg %p174
    $region30: #{classifier_forward.1} parent=5 // pred_check_branch
      %177 = sbr.rel (%p175) target = $region32
    $region31: #{classifier_forward.1} parent=5 // pred_region
      // Predicated region
      $region33: #{classifier_forward.1} parent=31 // pred_check
        %p178 = pneg %p31
      $region34: #{classifier_forward.1} parent=31 // pred_check_branch
        %180 = sbr.rel (%p178) target = $region36
      $region35: #{classifier_forward.1} parent=31 // pred_region
        %s181 = smul.u32 8, %s11
        %p182 = scmp.lt.s32.totalorder %s181, 15
        %s183 = scalar_select %p182, %s181, 15
        %s184 = smul.addr %s183, 4
        %s185 = scalar_lea.vmem %s0, %s184
        %s186 = smul.u32 8, %s11
      $region36: #{classifier_forward.1} parent=31 // pred_fallthru
        _
    $region32: #{classifier_forward.1} parent=5 // pred_fallthru
      _
    %p187 = scmp.le.s32.totalorder 1, %s11
    %p188 = scmp.lt.s32.totalorder %s11, 3
    %p189 = pnand %p187, %p188
    %p190 = pneg %p189
    // Predicated region
    $region37: #{classifier_forward.1} parent=5 // pred_check
      _
    $region38: #{classifier_forward.1} parent=5 // pred_check_branch
      %192 = sbr.rel (%p189) target = $region40
    $region39: #{classifier_forward.1} parent=5 // pred_region
      %s193 = ssub.s32 %s11, 1
      %s194 = smul.u32 8, %s16
      %p195 = scmp.lt.s32.totalorder %s194, 15
      %s196 = scalar_select %p195, %s194, 15
      %s197 = smul.addr %s196, 4
      %s198 = scalar_lea.vmem %s0, %s197
      %p199 = pneg %p37
      %p200 = pneg %p34
      %p201 = pneg %p58
      %p202 = pneg %p55
      %p203 = pneg %p79
      %p204 = pneg %p76
      %p205 = pneg %p100
      %p206 = pneg %p97
      %p207 = pneg %p121
      %p208 = pneg %p118
      %p209 = pneg %p147
      %p210 = pneg %p144
      %p211 = scmp.lt.s32.totalorder %s16, 1
      %s212 = scalar_select %p211, %s16, 1
      %s213 = smul.addr %s212, 8
      %s214 = scalar_lea.vmem %s5, %s213
      %s215 = smul.u32 8, %s16
      %p216 = scmp.lt.s32.totalorder %s215, 15
      %s217 = scalar_select %p216, %s215, 15
      %s218 = smul.addr %s217, 4
      %s219 = scalar_lea.vmem %s0, %s218
      %s220 = smul.u32 8, %s16
      %p221 = scmp.lt.s32.totalorder %s16, 1
      %s222 = scalar_select %p221, %s16, 1
      %s223 = smul.addr %s222, 8
      %s224 = scalar_lea.vmem %s5, %s223
      %v226 = vld [vmem:[%s1] sm:$0xf]
      %v227 = vld [vmem:[%s1 + $0x4] sm:$0xf]
      %v228 = vld [vmem:[%s1 + $0x8] sm:$0xf]
      %v229 = vld [vmem:[%s1 + $0xc] sm:$0xf]
      %v230 = vld [vmem:[%s2] sm:$0x1]
      %v232 = vlaneseq
      %v233 = vshrl.u32 %v232, 7
      %v234 = vsub.s32 0, %v233
      %v235 = vrot.slane %v230, %v234
      %v237 = vld [vmem:[%s4] sm:$0x1]
      %v239 = vlaneseq
      %v240 = vshrl.u32 %v239, 7
      %v241 = vsub.s32 0, %v240
      %v242 = vrot.slane %v237, %v241
      %v244 = vld [vmem:[%s219] sm:$0x1]
      %v245 = vld [vmem:[%s219 + $0x4] sm:$0x1]
      %v246 = vld [vmem:[%s219 + $0x8] sm:$0x1]
      %v247 = vld [vmem:[%s219 + $0xc] sm:$0x1]
      %v248 = vld [vmem:[%s219 + $0x10] sm:$0x1]
      %v249 = vld [vmem:[%s219 + $0x14] sm:$0x1]
      %v250 = vld [vmem:[%s219 + $0x18] sm:$0x1]
      %v251 = vld [vmem:[%s219 + $0x1c] sm:$0x1]
      %v260 = vunpack.c.l.b16 %v244
      %v261 = vunpack.c.l.b16 %v245
      %v262 = vunpack.c.l.b16 %v246
      %v263 = vunpack.c.l.b16 %v247
      %v264 = vunpack.c.l.b16 %v248
      %v265 = vunpack.c.l.b16 %v249
      %v266 = vunpack.c.l.b16 %v250
      %v267 = vunpack.c.l.b16 %v251
      %v268 = vpack.c.b16 %v260, %v260
      %v269 = vpack.c.b16 %v261, %v261
      %v270 = vpack.c.b16 %v262, %v262
      %v271 = vpack.c.b16 %v263, %v263
      %v272 = vpack.c.b16 %v264, %v264
      %v273 = vpack.c.b16 %v265, %v265
      %v274 = vpack.c.b16 %v266, %v266
      %v275 = vpack.c.b16 %v267, %v267
      %v276 = vunpack.c.l.b16 %v268
      %v277 = vunpack.c.l.b16 %v269
      %v278 = vunpack.c.l.b16 %v270
      %v279 = vunpack.c.l.b16 %v271
      %v280 = vunpack.c.l.b16 %v272
      %v281 = vunpack.c.l.b16 %v273
      %v282 = vunpack.c.l.b16 %v274
      %v283 = vunpack.c.l.b16 %v275
      %v284 = vrot.slane %v277, 7
      %vm285 = vcmask 1041409
      %v286 = vsel %vm285, %v284, %v276
      %v287 = vrot.slane %v278, 6
      %vm288 = vcmask 1042434
      %v289 = vsel %vm288, %v287, %v286
      %v290 = vrot.slane %v279, 5
      %vm291 = vcmask 1043459
      %v292 = vsel %vm291, %v290, %v289
      %v293 = vrot.slane %v280, 4
      %vm294 = vcmask 1044484
      %v295 = vsel %vm294, %v293, %v292
      %v296 = vrot.slane %v281, 3
      %vm297 = vcmask 1045509
      %v298 = vsel %vm297, %v296, %v295
      %v299 = vrot.slane %v282, 2
      %vm300 = vcmask 1046534
      %v301 = vsel %vm300, %v299, %v298
      %v302 = vrot.slane %v283, 1
      %vm303 = vcmask 1047559
      %v304 = vsel %vm303, %v302, %v301
      %v305 = vpack.c.b16 %v304, %v304
      %v310 = vunpack.c.l.b16 %v226
      %v311 = vunpack.c.l.b16 %v227
      %v312 = vunpack.c.l.b16 %v228
      %v313 = vunpack.c.l.b16 %v229
      %v314 = vpack.c.b16 %v311, %v310
      %v315 = vpack.c.b16 %v313, %v312
      %vm318 = vcmask 261120
      %v320 = vsel %vm318, %v305, 0
      %322 = vmatprep.subr.bf16.mxu0 0
      %323 = vmatpush1.bf16.msra.mxu0 0
      %324 = vmatprep.subr.bf16.mxu0 0
      %325 = vmatpush1.bf16.msra.mxu0 0
      %326 = vmatprep.subr.bf16.mxu0 0
      %327 = vmatpush1.bf16.msra.mxu0 0
      %328 = vmatprep.subr.bf16.mxu0 0
      %329 = vmatpush1.bf16.msra.mxu0 0
      %330 = vmatprep.subr.bf16.mxu0 0
      %331 = vmatpush1.bf16.msra.mxu0 0
      %332 = vmatprep.subr.bf16.mxu0 0
      %333 = vmatpush1.bf16.msra.mxu0 0
      %334 = vmatprep.subr.bf16.mxu0 0
      %335 = vmatpush1.bf16.msra.mxu0 %v315
      %336 = vmatprep.subr.bf16.mxu0 0
      %337 = vmatpush1.bf16.msra.mxu0 %v314
      %338 = vmatprep.subr.bf16.mxu0 0
      %339 = vmatpush2.bf16.msra.mxu0 0
      %340 = vmatprep.subr.bf16.mxu0 0
      %341 = vmatpush2.bf16.msra.mxu0 0
      %342 = vmatprep.subr.bf16.mxu0 0
      %343 = vmatpush2.bf16.msra.mxu0 0
      %344 = vmatprep.subr.bf16.mxu0 0
      %345 = vmatpush2.bf16.msra.mxu0 0
      %346 = vmatprep.subr.bf16.mxu0 0
      %347 = vmatpush2.bf16.msra.mxu0 0
      %348 = vmatprep.subr.bf16.mxu0 0
      %349 = vmatpush2.bf16.msra.mxu0 0
      %350 = vmatprep.subr.bf16.mxu0 0
      %351 = vmatpush2.bf16.msra.mxu0 0
      %352 = vmatprep.subr.bf16.mxu0 0
      %353 = vmatpush2.bf16.msra.mxu0 0
      %354 = vmatprep.mubr.bf16.mxu0 0
      %355 = vmatmul.mubr.bf16.gmra.mxu0 %v320
      %v356 = vpop.f32.mrf.mxu0
      %v357 = vadd.f32 %v235, %v356
      %v358 = vpop.f32.mrf.mxu0
      %v359 = vpop.f32.mrf.mxu0
      %v360 = vpop.f32.mrf.mxu0
      %361 = vdwg.mxu0
      %vm362 = vcmask 31744
      %v363 = vsel %vm362, %v357, -inf
      %364 = vmax.xlane.f32.xlu0 %v363
      %v365 = vpop.xlane.xlu0 %364
      %v366 = vsub.f32 %v357, %v365
      %v367 = vmul.f32 %v366, 1.442695
      %v368 = vpow.pop %v367
      %v369 = vsel %vm362, %v368, 0.0
      %370 = vadd.xlane.f32.xlu0 %v369
      %v371 = vpop.xlane.xlu0 %370
      %v372 = vlog2.pop %v371
      %v373 = vmul.f32 %v372, 0.6931472
      %v374 = vsub.f32 %v366, %v373
      %v375 = vpack.c.bf16 %v374, %v374
      %v376 = vld [vmem:[%s3] sm:$0x3]
      %v378 = vsel %vm362, %v375, 0
      %vm380 = vcmask 1041408
      %v382 = vsel %vm380, %v376, 0
      %384 = vmatprep.subr.bf16.mxu0 0
      %385 = vmatpush1.bf16.msra.mxu0 0
      %386 = vmatprep.subr.bf16.mxu0 0
      %387 = vmatpush1.bf16.msra.mxu0 0
      %388 = vmatprep.subr.bf16.mxu0 0
      %389 = vmatpush1.bf16.msra.mxu0 0
      %390 = vmatprep.subr.bf16.mxu0 0
      %391 = vmatpush1.bf16.msra.mxu0 0
      %392 = vmatprep.subr.bf16.mxu0 0
      %393 = vmatpush1.bf16.msra.mxu0 0
      %394 = vmatprep.subr.bf16.mxu0 0
      %395 = vmatpush1.bf16.msra.mxu0 0
      %396 = vmatprep.subr.bf16.mxu0 0
      %397 = vmatpush1.bf16.msra.mxu0 0
      %398 = vmatprep.subr.bf16.mxu0 0
      %399 = vmatpush1.bf16.msra.mxu0 %v382
      %400 = vmatprep.subr.bf16.mxu0 0
      %401 = vmatpush2.bf16.msra.mxu0 0
      %402 = vmatprep.subr.bf16.mxu0 0
      %403 = vmatpush2.bf16.msra.mxu0 0
      %404 = vmatprep.subr.bf16.mxu0 0
      %405 = vmatpush2.bf16.msra.mxu0 0
      %406 = vmatprep.subr.bf16.mxu0 0
      %407 = vmatpush2.bf16.msra.mxu0 0
      %408 = vmatprep.subr.bf16.mxu0 0
      %409 = vmatpush2.bf16.msra.mxu0 0
      %410 = vmatprep.subr.bf16.mxu0 0
      %411 = vmatpush2.bf16.msra.mxu0 0
      %412 = vmatprep.subr.bf16.mxu0 0
      %413 = vmatpush2.bf16.msra.mxu0 0
      %414 = vmatprep.subr.bf16.mxu0 0
      %415 = vmatpush2.bf16.msra.mxu0 0
      %416 = vmatprep.mubr.bf16.mxu0 0
      %417 = vmatmul.mubr.bf16.gmra.mxu0 %v378
      %v418 = vpop.f32.mrf.mxu0
      %v419 = vadd.f32 0.0, %v418
      %v420 = vpop.f32.mrf.mxu0
      %v421 = vpop.f32.mrf.mxu0
      %v422 = vpop.f32.mrf.mxu0
      %423 = vdwg.mxu0
      %v424 = vadd.f32 %v242, %v419
      %v425 = vrot.slane %v276, 1
      %v426 = vsel %vm285, %v277, %v425
      %v427 = vrot.slane %v278, 7
      %v428 = vsel %vm288, %v427, %v426
      %v429 = vrot.slane %v279, 6
      %v430 = vsel %vm291, %v429, %v428
      %v431 = vrot.slane %v280, 5
      %v432 = vsel %vm294, %v431, %v430
      %v433 = vrot.slane %v281, 4
      %v434 = vsel %vm297, %v433, %v432
      %v435 = vrot.slane %v282, 3
      %v436 = vsel %vm300, %v435, %v434
      %v437 = vrot.slane %v283, 2
      %v438 = vsel %vm303, %v437, %v436
      %v439 = vpack.c.b16 %v438, %v438
      %v441 = vsel %vm318, %v439, 0
      %443 = vmatprep.subr.bf16.mxu0 0
      %444 = vmatpush1.bf16.msra.mxu0 0
      %445 = vmatprep.subr.bf16.mxu0 0
      %446 = vmatpush1.bf16.msra.mxu0 0
      %447 = vmatprep.subr.bf16.mxu0 0
      %448 = vmatpush1.bf16.msra.mxu0 0
      %449 = vmatprep.subr.bf16.mxu0 0
      %450 = vmatpush1.bf16.msra.mxu0 0
      %451 = vmatprep.subr.bf16.mxu0 0
      %452 = vmatpush1.bf16.msra.mxu0 0
      %453 = vmatprep.subr.bf16.mxu0 0
      %454 = vmatpush1.bf16.msra.mxu0 0
      %455 = vmatprep.subr.bf16.mxu0 0
      %456 = vmatpush1.bf16.msra.mxu0 %v315
      %457 = vmatprep.subr.bf16.mxu0 0
      %458 = vmatpush1.bf16.msra.mxu0 %v314
      %459 = vmatprep.subr.bf16.mxu0 0
      %460 = vmatpush2.bf16.msra.mxu0 0
      %461 = vmatprep.subr.bf16.mxu0 0
      %462 = vmatpush2.bf16.msra.mxu0 0
      %463 = vmatprep.subr.bf16.mxu0 0
      %464 = vmatpush2.bf16.msra.mxu0 0
      %465 = vmatprep.subr.bf16.mxu0 0
      %466 = vmatpush2.bf16.msra.mxu0 0
      %467 = vmatprep.subr.bf16.mxu0 0
      %468 = vmatpush2.bf16.msra.mxu0 0
      %469 = vmatprep.subr.bf16.mxu0 0
      %470 = vmatpush2.bf16.msra.mxu0 0
      %471 = vmatprep.subr.bf16.mxu0 0
      %472 = vmatpush2.bf16.msra.mxu0 0
      %473 = vmatprep.subr.bf16.mxu0 0
      %474 = vmatpush2.bf16.msra.mxu0 0
      %475 = vmatprep.mubr.bf16.mxu0 0
      %476 = vmatmul.mubr.bf16.gmra.mxu0 %v441
      %v477 = vpop.f32.mrf.mxu0
      %v478 = vadd.f32 %v235, %v477
      %v479 = vpop.f32.mrf.mxu0
      %v480 = vpop.f32.mrf.mxu0
      %v481 = vpop.f32.mrf.mxu0
      %482 = vdwg.mxu0
      %v483 = vsel %vm362, %v478, -inf
      %484 = vmax.xlane.f32.xlu0 %v483
      %v485 = vpop.xlane.xlu0 %484
      %v486 = vsub.f32 %v478, %v485
      %v487 = vmul.f32 %v486, 1.442695
      %v488 = vpow.pop %v487
      %v489 = vsel %vm362, %v488, 0.0
      %490 = vadd.xlane.f32.xlu0 %v489
      %v491 = vpop.xlane.xlu0 %490
      %v492 = vlog2.pop %v491
      %v493 = vmul.f32 %v492, 0.6931472
      %v494 = vsub.f32 %v486, %v493
      %v495 = vpack.c.bf16 %v494, %v494
      %s496 = scalar_lea.vmem %s3, 2
      %v497 = vld [vmem:[%s496] sm:$0x3]
      %v499 = vsel %vm362, %v495, 0
      %v502 = vsel %vm380, %v497, 0
      %504 = vmatprep.subr.bf16.mxu0 0
      %505 = vmatpush1.bf16.msra.mxu0 0
      %506 = vmatprep.subr.bf16.mxu0 0
      %507 = vmatpush1.bf16.msra.mxu0 0
      %508 = vmatprep.subr.bf16.mxu0 0
      %509 = vmatpush1.bf16.msra.mxu0 0
      %510 = vmatprep.subr.bf16.mxu0 0
      %511 = vmatpush1.bf16.msra.mxu0 0
      %512 = vmatprep.subr.bf16.mxu0 0
      %513 = vmatpush1.bf16.msra.mxu0 0
      %514 = vmatprep.subr.bf16.mxu0 0
      %515 = vmatpush1.bf16.msra.mxu0 0
      %516 = vmatprep.subr.bf16.mxu0 0
      %517 = vmatpush1.bf16.msra.mxu0 0
      %518 = vmatprep.subr.bf16.mxu0 0
      %519 = vmatpush1.bf16.msra.mxu0 %v502
      %520 = vmatprep.subr.bf16.mxu0 0
      %521 = vmatpush2.bf16.msra.mxu0 0
      %522 = vmatprep.subr.bf16.mxu0 0
      %523 = vmatpush2.bf16.msra.mxu0 0
      %524 = vmatprep.subr.bf16.mxu0 0
      %525 = vmatpush2.bf16.msra.mxu0 0
      %526 = vmatprep.subr.bf16.mxu0 0
      %527 = vmatpush2.bf16.msra.mxu0 0
      %528 = vmatprep.subr.bf16.mxu0 0
      %529 = vmatpush2.bf16.msra.mxu0 0
      %530 = vmatprep.subr.bf16.mxu0 0
      %531 = vmatpush2.bf16.msra.mxu0 0
      %532 = vmatprep.subr.bf16.mxu0 0
      %533 = vmatpush2.bf16.msra.mxu0 0
      %534 = vmatprep.subr.bf16.mxu0 0
      %535 = vmatpush2.bf16.msra.mxu0 0
      %536 = vmatprep.mubr.bf16.mxu0 0
      %537 = vmatmul.mubr.bf16.gmra.mxu0 %v499
      %v538 = vpop.f32.mrf.mxu0
      %v539 = vadd.f32 0.0, %v538
      %v540 = vpop.f32.mrf.mxu0
      %v541 = vpop.f32.mrf.mxu0
      %v542 = vpop.f32.mrf.mxu0
      %543 = vdwg.mxu0
      %v544 = vadd.f32 %v424, %v539
      %v545 = vld [vmem:[%s219] sm:$0x2]
      %v546 = vld [vmem:[%s219 + $0x4] sm:$0x2]
      %v547 = vld [vmem:[%s219 + $0x8] sm:$0x2]
      %v548 = vld [vmem:[%s219 + $0xc] sm:$0x2]
      %v549 = vld [vmem:[%s219 + $0x10] sm:$0x2]
      %v550 = vld [vmem:[%s219 + $0x14] sm:$0x2]
      %v551 = vld [vmem:[%s219 + $0x18] sm:$0x2]
      %v552 = vld [vmem:[%s219 + $0x1c] sm:$0x2]
      %v561 = vunpack.c.l.b16 %v545
      %v562 = vunpack.c.l.b16 %v546
      %v563 = vunpack.c.l.b16 %v547
      %v564 = vunpack.c.l.b16 %v548
      %v565 = vunpack.c.l.b16 %v549
      %v566 = vunpack.c.l.b16 %v550
      %v567 = vunpack.c.l.b16 %v551
      %v568 = vunpack.c.l.b16 %v552
      %v569 = vpack.c.b16 %v561, %v561
      %v570 = vpack.c.b16 %v562, %v562
      %v571 = vpack.c.b16 %v563, %v563
      %v572 = vpack.c.b16 %v564, %v564
      %v573 = vpack.c.b16 %v565, %v565
      %v574 = vpack.c.b16 %v566, %v566
      %v575 = vpack.c.b16 %v567, %v567
      %v576 = vpack.c.b16 %v568, %v568
      %v577 = vunpack.c.l.b16 %v569
      %v578 = vunpack.c.l.b16 %v570
      %v579 = vunpack.c.l.b16 %v571
      %v580 = vunpack.c.l.b16 %v572
      %v581 = vunpack.c.l.b16 %v573
      %v582 = vunpack.c.l.b16 %v574
      %v583 = vunpack.c.l.b16 %v575
      %v584 = vunpack.c.l.b16 %v576
      %v585 = vrot.slane %v577, 2
      %v586 = vrot.slane %v578, 1
      %v587 = vsel %vm285, %v586, %v585
      %v588 = vsel %vm288, %v579, %v587
      %v589 = vrot.slane %v580, 7
      %v590 = vsel %vm291, %v589, %v588
      %v591 = vrot.slane %v581, 6
      %v592 = vsel %vm294, %v591, %v590
      %v593 = vrot.slane %v582, 5
      %v594 = vsel %vm297, %v593, %v592
      %v595 = vrot.slane %v583, 4
      %v596 = vsel %vm300, %v595, %v594
      %v597 = vrot.slane %v584, 3
      %v598 = vsel %vm303, %v597, %v596
      %v599 = vpack.c.b16 %v598, %v598
      %v601 = vsel %vm318, %v599, 0
      %603 = vmatprep.subr.bf16.mxu0 0
      %604 = vmatpush1.bf16.msra.mxu0 0
      %605 = vmatprep.subr.bf16.mxu0 0
      %606 = vmatpush1.bf16.msra.mxu0 0
      %607 = vmatprep.subr.bf16.mxu0 0
      %608 = vmatpush1.bf16.msra.mxu0 0
      %609 = vmatprep.subr.bf16.mxu0 0
      %610 = vmatpush1.bf16.msra.mxu0 0
      %611 = vmatprep.subr.bf16.mxu0 0
      %612 = vmatpush1.bf16.msra.mxu0 0
      %613 = vmatprep.subr.bf16.mxu0 0
      %614 = vmatpush1.bf16.msra.mxu0 0
      %615 = vmatprep.subr.bf16.mxu0 0
      %616 = vmatpush1.bf16.msra.mxu0 %v315
      %617 = vmatprep.subr.bf16.mxu0 0
      %618 = vmatpush1.bf16.msra.mxu0 %v314
      %619 = vmatprep.subr.bf16.mxu0 0
      %620 = vmatpush2.bf16.msra.mxu0 0
      %621 = vmatprep.subr.bf16.mxu0 0
      %622 = vmatpush2.bf16.msra.mxu0 0
      %623 = vmatprep.subr.bf16.mxu0 0
      %624 = vmatpush2.bf16.msra.mxu0 0
      %625 = vmatprep.subr.bf16.mxu0 0
      %626 = vmatpush2.bf16.msra.mxu0 0
      %627 = vmatprep.subr.bf16.mxu0 0
      %628 = vmatpush2.bf16.msra.mxu0 0
      %629 = vmatprep.subr.bf16.mxu0 0
      %630 = vmatpush2.bf16.msra.mxu0 0
      %631 = vmatprep.subr.bf16.mxu0 0
      %632 = vmatpush2.bf16.msra.mxu0 0
      %633 = vmatprep.subr.bf16.mxu0 0
      %634 = vmatpush2.bf16.msra.mxu0 0
      %635 = vmatprep.mubr.bf16.mxu0 0
      %636 = vmatmul.mubr.bf16.gmra.mxu0 %v601
      %v637 = vpop.f32.mrf.mxu0
      %v638 = vadd.f32 %v235, %v637
      %v639 = vpop.f32.mrf.mxu0
      %v640 = vpop.f32.mrf.mxu0
      %v641 = vpop.f32.mrf.mxu0
      %642 = vdwg.mxu0
      %v643 = vsel %vm362, %v638, -inf
      %644 = vmax.xlane.f32.xlu0 %v643
      %v645 = vpop.xlane.xlu0 %644
      %v646 = vsub.f32 %v638, %v645
      %v647 = vmul.f32 %v646, 1.442695
      %v648 = vpow.pop %v647
      %v649 = vsel %vm362, %v648, 0.0
      %650 = vadd.xlane.f32.xlu0 %v649
      %v651 = vpop.xlane.xlu0 %650
      %v652 = vlog2.pop %v651
      %v653 = vmul.f32 %v652, 0.6931472
      %v654 = vsub.f32 %v646, %v653
      %v655 = vpack.c.bf16 %v654, %v654
      %s656 = scalar_lea.vmem %s3, 4
      %v657 = vld [vmem:[%s656] sm:$0x3]
      %v659 = vsel %vm362, %v655, 0
      %v662 = vsel %vm380, %v657, 0
      %664 = vmatprep.subr.bf16.mxu0 0
      %665 = vmatpush1.bf16.msra.mxu0 0
      %666 = vmatprep.subr.bf16.mxu0 0
      %667 = vmatpush1.bf16.msra.mxu0 0
      %668 = vmatprep.subr.bf16.mxu0 0
      %669 = vmatpush1.bf16.msra.mxu0 0
      %670 = vmatprep.subr.bf16.mxu0 0
      %671 = vmatpush1.bf16.msra.mxu0 0
      %672 = vmatprep.subr.bf16.mxu0 0
      %673 = vmatpush1.bf16.msra.mxu0 0
      %674 = vmatprep.subr.bf16.mxu0 0
      %675 = vmatpush1.bf16.msra.mxu0 0
      %676 = vmatprep.subr.bf16.mxu0 0
      %677 = vmatpush1.bf16.msra.mxu0 0
      %678 = vmatprep.subr.bf16.mxu0 0
      %679 = vmatpush1.bf16.msra.mxu0 %v662
      %680 = vmatprep.subr.bf16.mxu0 0
      %681 = vmatpush2.bf16.msra.mxu0 0
      %682 = vmatprep.subr.bf16.mxu0 0
      %683 = vmatpush2.bf16.msra.mxu0 0
      %684 = vmatprep.subr.bf16.mxu0 0
      %685 = vmatpush2.bf16.msra.mxu0 0
      %686 = vmatprep.subr.bf16.mxu0 0
      %687 = vmatpush2.bf16.msra.mxu0 0
      %688 = vmatprep.subr.bf16.mxu0 0
      %689 = vmatpush2.bf16.msra.mxu0 0
      %690 = vmatprep.subr.bf16.mxu0 0
      %691 = vmatpush2.bf16.msra.mxu0 0
      %692 = vmatprep.subr.bf16.mxu0 0
      %693 = vmatpush2.bf16.msra.mxu0 0
      %694 = vmatprep.subr.bf16.mxu0 0
      %695 = vmatpush2.bf16.msra.mxu0 0
      %696 = vmatprep.mubr.bf16.mxu0 0
      %697 = vmatmul.mubr.bf16.gmra.mxu0 %v659
      %v698 = vpop.f32.mrf.mxu0
      %v699 = vadd.f32 0.0, %v698
      %v700 = vpop.f32.mrf.mxu0
      %v701 = vpop.f32.mrf.mxu0
      %v702 = vpop.f32.mrf.mxu0
      %703 = vdwg.mxu0
      %v704 = vadd.f32 %v544, %v699
      %v705 = vrot.slane %v577, 3
      %v706 = vrot.slane %v578, 2
      %v707 = vsel %vm285, %v706, %v705
      %v708 = vrot.slane %v579, 1
      %v709 = vsel %vm288, %v708, %v707
      %v710 = vsel %vm291, %v580, %v709
      %v711 = vrot.slane %v581, 7
      %v712 = vsel %vm294, %v711, %v710
      %v713 = vrot.slane %v582, 6
      %v714 = vsel %vm297, %v713, %v712
      %v715 = vrot.slane %v583, 5
      %v716 = vsel %vm300, %v715, %v714
      %v717 = vrot.slane %v584, 4
      %v718 = vsel %vm303, %v717, %v716
      %v719 = vpack.c.b16 %v718, %v718
      %v721 = vsel %vm318, %v719, 0
      %723 = vmatprep.subr.bf16.mxu0 0
      %724 = vmatpush1.bf16.msra.mxu0 0
      %725 = vmatprep.subr.bf16.mxu0 0
      %726 = vmatpush1.bf16.msra.mxu0 0
      %727 = vmatprep.subr.bf16.mxu0 0
      %728 = vmatpush1.bf16.msra.mxu0 0
      %729 = vmatprep.subr.bf16.mxu0 0
      %730 = vmatpush1.bf16.msra.mxu0 0
      %731 = vmatprep.subr.bf16.mxu0 0
      %732 = vmatpush1.bf16.msra.mxu0 0
      %733 = vmatprep.subr.bf16.mxu0 0
      %734 = vmatpush1.bf16.msra.mxu0 0
      %735 = vmatprep.subr.bf16.mxu0 0
      %736 = vmatpush1.bf16.msra.mxu0 %v315
      %737 = vmatprep.subr.bf16.mxu0 0
      %738 = vmatpush1.bf16.msra.mxu0 %v314
      %739 = vmatprep.subr.bf16.mxu0 0
      %740 = vmatpush2.bf16.msra.mxu0 0
      %741 = vmatprep.subr.bf16.mxu0 0
      %742 = vmatpush2.bf16.msra.mxu0 0
      %743 = vmatprep.subr.bf16.mxu0 0
      %744 = vmatpush2.bf16.msra.mxu0 0
      %745 = vmatprep.subr.bf16.mxu0 0
      %746 = vmatpush2.bf16.msra.mxu0 0
      %747 = vmatprep.subr.bf16.mxu0 0
      %748 = vmatpush2.bf16.msra.mxu0 0
      %749 = vmatprep.subr.bf16.mxu0 0
      %750 = vmatpush2.bf16.msra.mxu0 0
      %751 = vmatprep.subr.bf16.mxu0 0
      %752 = vmatpush2.bf16.msra.mxu0 0
      %753 = vmatprep.subr.bf16.mxu0 0
      %754 = vmatpush2.bf16.msra.mxu0 0
      %755 = vmatprep.mubr.bf16.mxu0 0
      %756 = vmatmul.mubr.bf16.gmra.mxu0 %v721
      %v757 = vpop.f32.mrf.mxu0
      %v758 = vadd.f32 %v235, %v757
      %v759 = vpop.f32.mrf.mxu0
      %v760 = vpop.f32.mrf.mxu0
      %v761 = vpop.f32.mrf.mxu0
      %762 = vdwg.mxu0
      %v763 = vsel %vm362, %v758, -inf
      %764 = vmax.xlane.f32.xlu0 %v763
      %v765 = vpop.xlane.xlu0 %764
      %v766 = vsub.f32 %v758, %v765
      %v767 = vmul.f32 %v766, 1.442695
      %v768 = vpow.pop %v767
      %v769 = vsel %vm362, %v768, 0.0
      %770 = vadd.xlane.f32.xlu0 %v769
      %v771 = vpop.xlane.xlu0 %770
      %v772 = vlog2.pop %v771
      %v773 = vmul.f32 %v772, 0.6931472
      %v774 = vsub.f32 %v766, %v773
      %v775 = vpack.c.bf16 %v774, %v774
      %s776 = scalar_lea.vmem %s3, 6
      %v777 = vld [vmem:[%s776] sm:$0x3]
      %v779 = vsel %vm362, %v775, 0
      %v782 = vsel %vm380, %v777, 0
      %784 = vmatprep.subr.bf16.mxu0 0
      %785 = vmatpush1.bf16.msra.mxu0 0
      %786 = vmatprep.subr.bf16.mxu0 0
      %787 = vmatpush1.bf16.msra.mxu0 0
      %788 = vmatprep.subr.bf16.mxu0 0
      %789 = vmatpush1.bf16.msra.mxu0 0
      %790 = vmatprep.subr.bf16.mxu0 0
      %791 = vmatpush1.bf16.msra.mxu0 0
      %792 = vmatprep.subr.bf16.mxu0 0
      %793 = vmatpush1.bf16.msra.mxu0 0
      %794 = vmatprep.subr.bf16.mxu0 0
      %795 = vmatpush1.bf16.msra.mxu0 0
      %796 = vmatprep.subr.bf16.mxu0 0
      %797 = vmatpush1.bf16.msra.mxu0 0
      %798 = vmatprep.subr.bf16.mxu0 0
      %799 = vmatpush1.bf16.msra.mxu0 %v782
      %800 = vmatprep.subr.bf16.mxu0 0
      %801 = vmatpush2.bf16.msra.mxu0 0
      %802 = vmatprep.subr.bf16.mxu0 0
      %803 = vmatpush2.bf16.msra.mxu0 0
      %804 = vmatprep.subr.bf16.mxu0 0
      %805 = vmatpush2.bf16.msra.mxu0 0
      %806 = vmatprep.subr.bf16.mxu0 0
      %807 = vmatpush2.bf16.msra.mxu0 0
      %808 = vmatprep.subr.bf16.mxu0 0
      %809 = vmatpush2.bf16.msra.mxu0 0
      %810 = vmatprep.subr.bf16.mxu0 0
      %811 = vmatpush2.bf16.msra.mxu0 0
      %812 = vmatprep.subr.bf16.mxu0 0
      %813 = vmatpush2.bf16.msra.mxu0 0
      %814 = vmatprep.subr.bf16.mxu0 0
      %815 = vmatpush2.bf16.msra.mxu0 0
      %816 = vmatprep.mubr.bf16.mxu0 0
      %817 = vmatmul.mubr.bf16.gmra.mxu0 %v779
      %v818 = vpop.f32.mrf.mxu0
      %v819 = vadd.f32 0.0, %v818
      %v820 = vpop.f32.mrf.mxu0
      %v821 = vpop.f32.mrf.mxu0
      %v822 = vpop.f32.mrf.mxu0
      %823 = vdwg.mxu0
      %v824 = vadd.f32 %v704, %v819
      %v825 = vld [vmem:[%s219] sm:$0x4]
      %v826 = vld [vmem:[%s219 + $0x4] sm:$0x4]
      %v827 = vld [vmem:[%s219 + $0x8] sm:$0x4]
      %v828 = vld [vmem:[%s219 + $0xc] sm:$0x4]
      %v829 = vld [vmem:[%s219 + $0x10] sm:$0x4]
      %v830 = vld [vmem:[%s219 + $0x14] sm:$0x4]
      %v831 = vld [vmem:[%s219 + $0x18] sm:$0x4]
      %v832 = vld [vmem:[%s219 + $0x1c] sm:$0x4]
      %v841 = vunpack.c.l.b16 %v825
      %v842 = vunpack.c.l.b16 %v826
      %v843 = vunpack.c.l.b16 %v827
      %v844 = vunpack.c.l.b16 %v828
      %v845 = vunpack.c.l.b16 %v829
      %v846 = vunpack.c.l.b16 %v830
      %v847 = vunpack.c.l.b16 %v831
      %v848 = vunpack.c.l.b16 %v832
      %v849 = vpack.c.b16 %v841, %v841
      %v850 = vpack.c.b16 %v842, %v842
      %v851 = vpack.c.b16 %v843, %v843
      %v852 = vpack.c.b16 %v844, %v844
      %v853 = vpack.c.b16 %v845, %v845
      %v854 = vpack.c.b16 %v846, %v846
      %v855 = vpack.c.b16 %v847, %v847
      %v856 = vpack.c.b16 %v848, %v848
      %v857 = vunpack.c.l.b16 %v849
      %v858 = vunpack.c.l.b16 %v850
      %v859 = vunpack.c.l.b16 %v851
      %v860 = vunpack.c.l.b16 %v852
      %v861 = vunpack.c.l.b16 %v853
      %v862 = vunpack.c.l.b16 %v854
      %v863 = vunpack.c.l.b16 %v855
      %v864 = vunpack.c.l.b16 %v856
      %v865 = vrot.slane %v857, 4
      %v866 = vrot.slane %v858, 3
      %v867 = vsel %vm285, %v866, %v865
      %v868 = vrot.slane %v859, 2
      %v869 = vsel %vm288, %v868, %v867
      %v870 = vrot.slane %v860, 1
      %v871 = vsel %vm291, %v870, %v869
      %v872 = vsel %vm294, %v861, %v871
      %v873 = vrot.slane %v862, 7
      %v874 = vsel %vm297, %v873, %v872
      %v875 = vrot.slane %v863, 6
      %v876 = vsel %vm300, %v875, %v874
      %v877 = vrot.slane %v864, 5
      %v878 = vsel %vm303, %v877, %v876
      %v879 = vpack.c.b16 %v878, %v878
      %v881 = vsel %vm318, %v879, 0
      %883 = vmatprep.subr.bf16.mxu0 0
      %884 = vmatpush1.bf16.msra.mxu0 0
      %885 = vmatprep.subr.bf16.mxu0 0
      %886 = vmatpush1.bf16.msra.mxu0 0
      %887 = vmatprep.subr.bf16.mxu0 0
      %888 = vmatpush1.bf16.msra.mxu0 0
      %889 = vmatprep.subr.bf16.mxu0 0
      %890 = vmatpush1.bf16.msra.mxu0 0
      %891 = vmatprep.subr.bf16.mxu0 0
      %892 = vmatpush1.bf16.msra.mxu0 0
      %893 = vmatprep.subr.bf16.mxu0 0
      %894 = vmatpush1.bf16.msra.mxu0 0
      %895 = vmatprep.subr.bf16.mxu0 0
      %896 = vmatpush1.bf16.msra.mxu0 %v315
      %897 = vmatprep.subr.bf16.mxu0 0
      %898 = vmatpush1.bf16.msra.mxu0 %v314
      %899 = vmatprep.subr.bf16.mxu0 0
      %900 = vmatpush2.bf16.msra.mxu0 0
      %901 = vmatprep.subr.bf16.mxu0 0
      %902 = vmatpush2.bf16.msra.mxu0 0
      %903 = vmatprep.subr.bf16.mxu0 0
      %904 = vmatpush2.bf16.msra.mxu0 0
      %905 = vmatprep.subr.bf16.mxu0 0
      %906 = vmatpush2.bf16.msra.mxu0 0
      %907 = vmatprep.subr.bf16.mxu0 0
      %908 = vmatpush2.bf16.msra.mxu0 0
      %909 = vmatprep.subr.bf16.mxu0 0
      %910 = vmatpush2.bf16.msra.mxu0 0
      %911 = vmatprep.subr.bf16.mxu0 0
      %912 = vmatpush2.bf16.msra.mxu0 0
      %913 = vmatprep.subr.bf16.mxu0 0
      %914 = vmatpush2.bf16.msra.mxu0 0
      %915 = vmatprep.mubr.bf16.mxu0 0
      %916 = vmatmul.mubr.bf16.gmra.mxu0 %v881
      %v917 = vpop.f32.mrf.mxu0
      %v918 = vadd.f32 %v235, %v917
      %v919 = vpop.f32.mrf.mxu0
      %v920 = vpop.f32.mrf.mxu0
      %v921 = vpop.f32.mrf.mxu0
      %922 = vdwg.mxu0
      %v923 = vsel %vm362, %v918, -inf
      %924 = vmax.xlane.f32.xlu0 %v923
      %v925 = vpop.xlane.xlu0 %924
      %v926 = vsub.f32 %v918, %v925
      %v927 = vmul.f32 %v926, 1.442695
      %v928 = vpow.pop %v927
      %v929 = vsel %vm362, %v928, 0.0
      %930 = vadd.xlane.f32.xlu0 %v929
      %v931 = vpop.xlane.xlu0 %930
      %v932 = vlog2.pop %v931
      %v933 = vmul.f32 %v932, 0.6931472
      %v934 = vsub.f32 %v926, %v933
      %v935 = vpack.c.bf16 %v934, %v934
      %s936 = scalar_lea.vmem %s3, 8
      %v937 = vld [vmem:[%s936] sm:$0x3]
      %v939 = vsel %vm362, %v935, 0
      %v942 = vsel %vm380, %v937, 0
      %944 = vmatprep.subr.bf16.mxu0 0
      %945 = vmatpush1.bf16.msra.mxu0 0
      %946 = vmatprep.subr.bf16.mxu0 0
      %947 = vmatpush1.bf16.msra.mxu0 0
      %948 = vmatprep.subr.bf16.mxu0 0
      %949 = vmatpush1.bf16.msra.mxu0 0
      %950 = vmatprep.subr.bf16.mxu0 0
      %951 = vmatpush1.bf16.msra.mxu0 0
      %952 = vmatprep.subr.bf16.mxu0 0
      %953 = vmatpush1.bf16.msra.mxu0 0
      %954 = vmatprep.subr.bf16.mxu0 0
      %955 = vmatpush1.bf16.msra.mxu0 0
      %956 = vmatprep.subr.bf16.mxu0 0
      %957 = vmatpush1.bf16.msra.mxu0 0
      %958 = vmatprep.subr.bf16.mxu0 0
      %959 = vmatpush1.bf16.msra.mxu0 %v942
      %960 = vmatprep.subr.bf16.mxu0 0
      %961 = vmatpush2.bf16.msra.mxu0 0
      %962 = vmatprep.subr.bf16.mxu0 0
      %963 = vmatpush2.bf16.msra.mxu0 0
      %964 = vmatprep.subr.bf16.mxu0 0
      %965 = vmatpush2.bf16.msra.mxu0 0
      %966 = vmatprep.subr.bf16.mxu0 0
      %967 = vmatpush2.bf16.msra.mxu0 0
      %968 = vmatprep.subr.bf16.mxu0 0
      %969 = vmatpush2.bf16.msra.mxu0 0
      %970 = vmatprep.subr.bf16.mxu0 0
      %971 = vmatpush2.bf16.msra.mxu0 0
      %972 = vmatprep.subr.bf16.mxu0 0
      %973 = vmatpush2.bf16.msra.mxu0 0
      %974 = vmatprep.subr.bf16.mxu0 0
      %975 = vmatpush2.bf16.msra.mxu0 0
      %976 = vmatprep.mubr.bf16.mxu0 0
      %977 = vmatmul.mubr.bf16.gmra.mxu0 %v939
      %v978 = vpop.f32.mrf.mxu0
      %v979 = vadd.f32 0.0, %v978
      %v980 = vpop.f32.mrf.mxu0
      %v981 = vpop.f32.mrf.mxu0
      %v982 = vpop.f32.mrf.mxu0
      %983 = vdwg.mxu0
      %v984 = vadd.f32 %v824, %v979
      %v985 = vrot.slane %v857, 5
      %v986 = vrot.slane %v858, 4
      %v987 = vsel %vm285, %v986, %v985
      %v988 = vrot.slane %v859, 3
      %v989 = vsel %vm288, %v988, %v987
      %v990 = vrot.slane %v860, 2
      %v991 = vsel %vm291, %v990, %v989
      %v992 = vrot.slane %v861, 1
      %v993 = vsel %vm294, %v992, %v991
      %v994 = vsel %vm297, %v862, %v993
      %v995 = vrot.slane %v863, 7
      %v996 = vsel %vm300, %v995, %v994
      %v997 = vrot.slane %v864, 6
      %v998 = vsel %vm303, %v997, %v996
      %v999 = vpack.c.b16 %v998, %v998
      %v1001 = vsel %vm318, %v999, 0
      %1003 = vmatprep.subr.bf16.mxu0 0
      %1004 = vmatpush1.bf16.msra.mxu0 0
      %1005 = vmatprep.subr.bf16.mxu0 0
      %1006 = vmatpush1.bf16.msra.mxu0 0
      %1007 = vmatprep.subr.bf16.mxu0 0
      %1008 = vmatpush1.bf16.msra.mxu0 0
      %1009 = vmatprep.subr.bf16.mxu0 0
      %1010 = vmatpush1.bf16.msra.mxu0 0
      %1011 = vmatprep.subr.bf16.mxu0 0
      %1012 = vmatpush1.bf16.msra.mxu0 0
      %1013 = vmatprep.subr.bf16.mxu0 0
      %1014 = vmatpush1.bf16.msra.mxu0 0
      %1015 = vmatprep.subr.bf16.mxu0 0
      %1016 = vmatpush1.bf16.msra.mxu0 %v315
      %1017 = vmatprep.subr.bf16.mxu0 0
      %1018 = vmatpush1.bf16.msra.mxu0 %v314
      %1019 = vmatprep.subr.bf16.mxu0 0
      %1020 = vmatpush2.bf16.msra.mxu0 0
      %1021 = vmatprep.subr.bf16.mxu0 0
      %1022 = vmatpush2.bf16.msra.mxu0 0
      %1023 = vmatprep.subr.bf16.mxu0 0
      %1024 = vmatpush2.bf16.msra.mxu0 0
      %1025 = vmatprep.subr.bf16.mxu0 0
      %1026 = vmatpush2.bf16.msra.mxu0 0
      %1027 = vmatprep.subr.bf16.mxu0 0
      %1028 = vmatpush2.bf16.msra.mxu0 0
      %1029 = vmatprep.subr.bf16.mxu0 0
      %1030 = vmatpush2.bf16.msra.mxu0 0
      %1031 = vmatprep.subr.bf16.mxu0 0
      %1032 = vmatpush2.bf16.msra.mxu0 0
      %1033 = vmatprep.subr.bf16.mxu0 0
      %1034 = vmatpush2.bf16.msra.mxu0 0
      %1035 = vmatprep.mubr.bf16.mxu0 0
      %1036 = vmatmul.mubr.bf16.gmra.mxu0 %v1001
      %v1037 = vpop.f32.mrf.mxu0
      %v1038 = vadd.f32 %v235, %v1037
      %v1039 = vpop.f32.mrf.mxu0
      %v1040 = vpop.f32.mrf.mxu0
      %v1041 = vpop.f32.mrf.mxu0
      %1042 = vdwg.mxu0
      %v1043 = vsel %vm362, %v1038, -inf
      %1044 = vmax.xlane.f32.xlu0 %v1043
      %v1045 = vpop.xlane.xlu0 %1044
      %v1046 = vsub.f32 %v1038, %v1045
      %v1047 = vmul.f32 %v1046, 1.442695
      %v1048 = vpow.pop %v1047
      %v1049 = vsel %vm362, %v1048, 0.0
      %1050 = vadd.xlane.f32.xlu0 %v1049
      %v1051 = vpop.xlane.xlu0 %1050
      %v1052 = vlog2.pop %v1051
      %v1053 = vmul.f32 %v1052, 0.6931472
      %v1054 = vsub.f32 %v1046, %v1053
      %v1055 = vpack.c.bf16 %v1054, %v1054
      %s1056 = scalar_lea.vmem %s3, 10
      %v1057 = vld [vmem:[%s1056] sm:$0x3]
      %v1059 = vsel %vm362, %v1055, 0
      %v1062 = vsel %vm380, %v1057, 0
      %1064 = vmatprep.subr.bf16.mxu0 0
      %1065 = vmatpush1.bf16.msra.mxu0 0
      %1066 = vmatprep.subr.bf16.mxu0 0
      %1067 = vmatpush1.bf16.msra.mxu0 0
      %1068 = vmatprep.subr.bf16.mxu0 0
      %1069 = vmatpush1.bf16.msra.mxu0 0
      %1070 = vmatprep.subr.bf16.mxu0 0
      %1071 = vmatpush1.bf16.msra.mxu0 0
      %1072 = vmatprep.subr.bf16.mxu0 0
      %1073 = vmatpush1.bf16.msra.mxu0 0
      %1074 = vmatprep.subr.bf16.mxu0 0
      %1075 = vmatpush1.bf16.msra.mxu0 0
      %1076 = vmatprep.subr.bf16.mxu0 0
      %1077 = vmatpush1.bf16.msra.mxu0 0
      %1078 = vmatprep.subr.bf16.mxu0 0
      %1079 = vmatpush1.bf16.msra.mxu0 %v1062
      %1080 = vmatprep.subr.bf16.mxu0 0
      %1081 = vmatpush2.bf16.msra.mxu0 0
      %1082 = vmatprep.subr.bf16.mxu0 0
      %1083 = vmatpush2.bf16.msra.mxu0 0
      %1084 = vmatprep.subr.bf16.mxu0 0
      %1085 = vmatpush2.bf16.msra.mxu0 0
      %1086 = vmatprep.subr.bf16.mxu0 0
      %1087 = vmatpush2.bf16.msra.mxu0 0
      %1088 = vmatprep.subr.bf16.mxu0 0
      %1089 = vmatpush2.bf16.msra.mxu0 0
      %1090 = vmatprep.subr.bf16.mxu0 0
      %1091 = vmatpush2.bf16.msra.mxu0 0
      %1092 = vmatprep.subr.bf16.mxu0 0
      %1093 = vmatpush2.bf16.msra.mxu0 0
      %1094 = vmatprep.subr.bf16.mxu0 0
      %1095 = vmatpush2.bf16.msra.mxu0 0
      %1096 = vmatprep.mubr.bf16.mxu0 0
      %1097 = vmatmul.mubr.bf16.gmra.mxu0 %v1059
      %v1098 = vpop.f32.mrf.mxu0
      %v1099 = vadd.f32 0.0, %v1098
      %v1100 = vpop.f32.mrf.mxu0
      %v1101 = vpop.f32.mrf.mxu0
      %v1102 = vpop.f32.mrf.mxu0
      %1103 = vdwg.mxu0
      %v1104 = vadd.f32 %v984, %v1099
      %v1105 = vld [vmem:[%s219] sm:$0x8]
      %v1106 = vld [vmem:[%s219 + $0x4] sm:$0x8]
      %v1107 = vld [vmem:[%s219 + $0x8] sm:$0x8]
      %v1108 = vld [vmem:[%s219 + $0xc] sm:$0x8]
      %v1109 = vld [vmem:[%s219 + $0x10] sm:$0x8]
      %v1110 = vld [vmem:[%s219 + $0x14] sm:$0x8]
      %v1111 = vld [vmem:[%s219 + $0x18] sm:$0x8]
      %v1112 = vld [vmem:[%s219 + $0x1c] sm:$0x8]
      %v1121 = vunpack.c.l.b16 %v1105
      %v1122 = vunpack.c.l.b16 %v1106
      %v1123 = vunpack.c.l.b16 %v1107
      %v1124 = vunpack.c.l.b16 %v1108
      %v1125 = vunpack.c.l.b16 %v1109
      %v1126 = vunpack.c.l.b16 %v1110
      %v1127 = vunpack.c.l.b16 %v1111
      %v1128 = vunpack.c.l.b16 %v1112
      %v1129 = vpack.c.b16 %v1121, %v1121
      %v1130 = vpack.c.b16 %v1122, %v1122
      %v1131 = vpack.c.b16 %v1123, %v1123
      %v1132 = vpack.c.b16 %v1124, %v1124
      %v1133 = vpack.c.b16 %v1125, %v1125
      %v1134 = vpack.c.b16 %v1126, %v1126
      %v1135 = vpack.c.b16 %v1127, %v1127
      %v1136 = vpack.c.b16 %v1128, %v1128
      %v1137 = vunpack.c.l.b16 %v1129
      %v1138 = vunpack.c.l.b16 %v1130
      %v1139 = vunpack.c.l.b16 %v1131
      %v1140 = vunpack.c.l.b16 %v1132
      %v1141 = vunpack.c.l.b16 %v1133
      %v1142 = vunpack.c.l.b16 %v1134
      %v1143 = vunpack.c.l.b16 %v1135
      %v1144 = vunpack.c.l.b16 %v1136
      %v1145 = vrot.slane %v1137, 6
      %v1146 = vrot.slane %v1138, 5
      %v1147 = vsel %vm285, %v1146, %v1145
      %v1148 = vrot.slane %v1139, 4
      %v1149 = vsel %vm288, %v1148, %v1147
      %v1150 = vrot.slane %v1140, 3
      %v1151 = vsel %vm291, %v1150, %v1149
      %v1152 = vrot.slane %v1141, 2
      %v1153 = vsel %vm294, %v1152, %v1151
      %v1154 = vrot.slane %v1142, 1
      %v1155 = vsel %vm297, %v1154, %v1153
      %v1156 = vsel %vm300, %v1143, %v1155
      %v1157 = vrot.slane %v1144, 7
      %v1158 = vsel %vm303, %v1157, %v1156
      %v1159 = vpack.c.b16 %v1158, %v1158
      %v1161 = vsel %vm318, %v1159, 0
      %1163 = vmatprep.subr.bf16.mxu0 0
      %1164 = vmatpush1.bf16.msra.mxu0 0
      %1165 = vmatprep.subr.bf16.mxu0 0
      %1166 = vmatpush1.bf16.msra.mxu0 0
      %1167 = vmatprep.subr.bf16.mxu0 0
      %1168 = vmatpush1.bf16.msra.mxu0 0
      %1169 = vmatprep.subr.bf16.mxu0 0
      %1170 = vmatpush1.bf16.msra.mxu0 0
      %1171 = vmatprep.subr.bf16.mxu0 0
      %1172 = vmatpush1.bf16.msra.mxu0 0
      %1173 = vmatprep.subr.bf16.mxu0 0
      %1174 = vmatpush1.bf16.msra.mxu0 0
      %1175 = vmatprep.subr.bf16.mxu0 0
      %1176 = vmatpush1.bf16.msra.mxu0 %v315
      %1177 = vmatprep.subr.bf16.mxu0 0
      %1178 = vmatpush1.bf16.msra.mxu0 %v314
      %1179 = vmatprep.subr.bf16.mxu0 0
      %1180 = vmatpush2.bf16.msra.mxu0 0
      %1181 = vmatprep.subr.bf16.mxu0 0
      %1182 = vmatpush2.bf16.msra.mxu0 0
      %1183 = vmatprep.subr.bf16.mxu0 0
      %1184 = vmatpush2.bf16.msra.mxu0 0
      %1185 = vmatprep.subr.bf16.mxu0 0
      %1186 = vmatpush2.bf16.msra.mxu0 0
      %1187 = vmatprep.subr.bf16.mxu0 0
      %1188 = vmatpush2.bf16.msra.mxu0 0
      %1189 = vmatprep.subr.bf16.mxu0 0
      %1190 = vmatpush2.bf16.msra.mxu0 0
      %1191 = vmatprep.subr.bf16.mxu0 0
      %1192 = vmatpush2.bf16.msra.mxu0 0
      %1193 = vmatprep.subr.bf16.mxu0 0
      %1194 = vmatpush2.bf16.msra.mxu0 0
      %1195 = vmatprep.mubr.bf16.mxu0 0
      %1196 = vmatmul.mubr.bf16.gmra.mxu0 %v1161
      %v1197 = vpop.f32.mrf.mxu0
      %v1198 = vadd.f32 %v235, %v1197
      %v1199 = vpop.f32.mrf.mxu0
      %v1200 = vpop.f32.mrf.mxu0
      %v1201 = vpop.f32.mrf.mxu0
      %1202 = vdwg.mxu0
      %v1203 = vsel %vm362, %v1198, -inf
      %1204 = vmax.xlane.f32.xlu0 %v1203
      %v1205 = vpop.xlane.xlu0 %1204
      %v1206 = vsub.f32 %v1198, %v1205
      %v1207 = vmul.f32 %v1206, 1.442695
      %v1208 = vpow.pop %v1207
      %v1209 = vsel %vm362, %v1208, 0.0
      %1210 = vadd.xlane.f32.xlu0 %v1209
      %v1211 = vpop.xlane.xlu0 %1210
      %v1212 = vlog2.pop %v1211
      %v1213 = vmul.f32 %v1212, 0.6931472
      %v1214 = vsub.f32 %v1206, %v1213
      %v1215 = vpack.c.bf16 %v1214, %v1214
      %s1216 = scalar_lea.vmem %s3, 12
      %v1217 = vld [vmem:[%s1216] sm:$0x3]
      %v1219 = vsel %vm362, %v1215, 0
      %v1222 = vsel %vm380, %v1217, 0
      %1224 = vmatprep.subr.bf16.mxu0 0
      %1225 = vmatpush1.bf16.msra.mxu0 0
      %1226 = vmatprep.subr.bf16.mxu0 0
      %1227 = vmatpush1.bf16.msra.mxu0 0
      %1228 = vmatprep.subr.bf16.mxu0 0
      %1229 = vmatpush1.bf16.msra.mxu0 0
      %1230 = vmatprep.subr.bf16.mxu0 0
      %1231 = vmatpush1.bf16.msra.mxu0 0
      %1232 = vmatprep.subr.bf16.mxu0 0
      %1233 = vmatpush1.bf16.msra.mxu0 0
      %1234 = vmatprep.subr.bf16.mxu0 0
      %1235 = vmatpush1.bf16.msra.mxu0 0
      %1236 = vmatprep.subr.bf16.mxu0 0
      %1237 = vmatpush1.bf16.msra.mxu0 0
      %1238 = vmatprep.subr.bf16.mxu0 0
      %1239 = vmatpush1.bf16.msra.mxu0 %v1222
      %1240 = vmatprep.subr.bf16.mxu0 0
      %1241 = vmatpush2.bf16.msra.mxu0 0
      %1242 = vmatprep.subr.bf16.mxu0 0
      %1243 = vmatpush2.bf16.msra.mxu0 0
      %1244 = vmatprep.subr.bf16.mxu0 0
      %1245 = vmatpush2.bf16.msra.mxu0 0
      %1246 = vmatprep.subr.bf16.mxu0 0
      %1247 = vmatpush2.bf16.msra.mxu0 0
      %1248 = vmatprep.subr.bf16.mxu0 0
      %1249 = vmatpush2.bf16.msra.mxu0 0
      %1250 = vmatprep.subr.bf16.mxu0 0
      %1251 = vmatpush2.bf16.msra.mxu0 0
      %1252 = vmatprep.subr.bf16.mxu0 0
      %1253 = vmatpush2.bf16.msra.mxu0 0
      %1254 = vmatprep.subr.bf16.mxu0 0
      %1255 = vmatpush2.bf16.msra.mxu0 0
      %1256 = vmatprep.mubr.bf16.mxu0 0
      %1257 = vmatmul.mubr.bf16.gmra.mxu0 %v1219
      %v1258 = vpop.f32.mrf.mxu0
      %v1259 = vadd.f32 0.0, %v1258
      %v1260 = vpop.f32.mrf.mxu0
      %v1261 = vpop.f32.mrf.mxu0
      %v1262 = vpop.f32.mrf.mxu0
      %1263 = vdwg.mxu0
      %v1264 = vadd.f32 %v1104, %v1259
      %v1265 = vrot.slane %v1137, 7
      %v1266 = vrot.slane %v1138, 6
      %v1267 = vsel %vm285, %v1266, %v1265
      %v1268 = vrot.slane %v1139, 5
      %v1269 = vsel %vm288, %v1268, %v1267
      %v1270 = vrot.slane %v1140, 4
      %v1271 = vsel %vm291, %v1270, %v1269
      %v1272 = vrot.slane %v1141, 3
      %v1273 = vsel %vm294, %v1272, %v1271
      %v1274 = vrot.slane %v1142, 2
      %v1275 = vsel %vm297, %v1274, %v1273
      %v1276 = vrot.slane %v1143, 1
      %v1277 = vsel %vm300, %v1276, %v1275
      %v1278 = vsel %vm303, %v1144, %v1277
      %v1279 = vpack.c.b16 %v1278, %v1278
      %v1281 = vsel %vm318, %v1279, 0
      %1283 = vmatprep.subr.bf16.mxu0 0
      %1284 = vmatpush1.bf16.msra.mxu0 0
      %1285 = vmatprep.subr.bf16.mxu0 0
      %1286 = vmatpush1.bf16.msra.mxu0 0
      %1287 = vmatprep.subr.bf16.mxu0 0
      %1288 = vmatpush1.bf16.msra.mxu0 0
      %1289 = vmatprep.subr.bf16.mxu0 0
      %1290 = vmatpush1.bf16.msra.mxu0 0
      %1291 = vmatprep.subr.bf16.mxu0 0
      %1292 = vmatpush1.bf16.msra.mxu0 0
      %1293 = vmatprep.subr.bf16.mxu0 0
      %1294 = vmatpush1.bf16.msra.mxu0 0
      %1295 = vmatprep.subr.bf16.mxu0 0
      %1296 = vmatpush1.bf16.msra.mxu0 %v315
      %1297 = vmatprep.subr.bf16.mxu0 0
      %1298 = vmatpush1.bf16.msra.mxu0 %v314
      %1299 = vmatprep.subr.bf16.mxu0 0
      %1300 = vmatpush2.bf16.msra.mxu0 0
      %1301 = vmatprep.subr.bf16.mxu0 0
      %1302 = vmatpush2.bf16.msra.mxu0 0
      %1303 = vmatprep.subr.bf16.mxu0 0
      %1304 = vmatpush2.bf16.msra.mxu0 0
      %1305 = vmatprep.subr.bf16.mxu0 0
      %1306 = vmatpush2.bf16.msra.mxu0 0
      %1307 = vmatprep.subr.bf16.mxu0 0
      %1308 = vmatpush2.bf16.msra.mxu0 0
      %1309 = vmatprep.subr.bf16.mxu0 0
      %1310 = vmatpush2.bf16.msra.mxu0 0
      %1311 = vmatprep.subr.bf16.mxu0 0
      %1312 = vmatpush2.bf16.msra.mxu0 0
      %1313 = vmatprep.subr.bf16.mxu0 0
      %1314 = vmatpush2.bf16.msra.mxu0 0
      %1315 = vmatprep.mubr.bf16.mxu0 0
      %1316 = vmatmul.mubr.bf16.gmra.mxu0 %v1281
      %v1317 = vpop.f32.mrf.mxu0
      %v1318 = vadd.f32 %v235, %v1317
      %v1319 = vpop.f32.mrf.mxu0
      %v1320 = vpop.f32.mrf.mxu0
      %v1321 = vpop.f32.mrf.mxu0
      %1322 = vdwg.mxu0
      %v1323 = vsel %vm362, %v1318, -inf
      %1324 = vmax.xlane.f32.xlu0 %v1323
      %v1325 = vpop.xlane.xlu0 %1324
      %v1326 = vsub.f32 %v1318, %v1325
      %v1327 = vmul.f32 %v1326, 1.442695
      %v1328 = vpow.pop %v1327
      %v1329 = vsel %vm362, %v1328, 0.0
      %1330 = vadd.xlane.f32.xlu0 %v1329
      %v1331 = vpop.xlane.xlu0 %1330
      %v1332 = vlog2.pop %v1331
      %v1333 = vmul.f32 %v1332, 0.6931472
      %v1334 = vsub.f32 %v1326, %v1333
      %v1335 = vpack.c.bf16 %v1334, %v1334
      %s1336 = scalar_lea.vmem %s3, 14
      %v1337 = vld [vmem:[%s1336] sm:$0x3]
      %v1339 = vsel %vm362, %v1335, 0
      %v1342 = vsel %vm380, %v1337, 0
      %1344 = vmatprep.subr.bf16.mxu0 0
      %1345 = vmatpush1.bf16.msra.mxu0 0
      %1346 = vmatprep.subr.bf16.mxu0 0
      %1347 = vmatpush1.bf16.msra.mxu0 0
      %1348 = vmatprep.subr.bf16.mxu0 0
      %1349 = vmatpush1.bf16.msra.mxu0 0
      %1350 = vmatprep.subr.bf16.mxu0 0
      %1351 = vmatpush1.bf16.msra.mxu0 0
      %1352 = vmatprep.subr.bf16.mxu0 0
      %1353 = vmatpush1.bf16.msra.mxu0 0
      %1354 = vmatprep.subr.bf16.mxu0 0
      %1355 = vmatpush1.bf16.msra.mxu0 0
      %1356 = vmatprep.subr.bf16.mxu0 0
      %1357 = vmatpush1.bf16.msra.mxu0 0
      %1358 = vmatprep.subr.bf16.mxu0 0
      %1359 = vmatpush1.bf16.msra.mxu0 %v1342
      %1360 = vmatprep.subr.bf16.mxu0 0
      %1361 = vmatpush2.bf16.msra.mxu0 0
      %1362 = vmatprep.subr.bf16.mxu0 0
      %1363 = vmatpush2.bf16.msra.mxu0 0
      %1364 = vmatprep.subr.bf16.mxu0 0
      %1365 = vmatpush2.bf16.msra.mxu0 0
      %1366 = vmatprep.subr.bf16.mxu0 0
      %1367 = vmatpush2.bf16.msra.mxu0 0
      %1368 = vmatprep.subr.bf16.mxu0 0
      %1369 = vmatpush2.bf16.msra.mxu0 0
      %1370 = vmatprep.subr.bf16.mxu0 0
      %1371 = vmatpush2.bf16.msra.mxu0 0
      %1372 = vmatprep.subr.bf16.mxu0 0
      %1373 = vmatpush2.bf16.msra.mxu0 0
      %1374 = vmatprep.subr.bf16.mxu0 0
      %1375 = vmatpush2.bf16.msra.mxu0 0
      %1376 = vmatprep.mubr.bf16.mxu0 0
      %1377 = vmatmul.mubr.bf16.gmra.mxu0 %v1339
      %v1378 = vpop.f32.mrf.mxu0
      %v1379 = vadd.f32 0.0, %v1378
      %v1380 = vpop.f32.mrf.mxu0
      %v1381 = vpop.f32.mrf.mxu0
      %v1382 = vpop.f32.mrf.mxu0
      %1383 = vdwg.mxu0
      %v1384 = vadd.f32 %v1264, %v1379
      %1385 = vmax.xlane.f32.xlu0 %v1384
      %v1386 = vpop.xlane.xlu0 %1385
      %v1387 = vsub.f32 %v1384, %v1386
      %v1388 = vmul.f32 %v1387, 1.442695
      %v1389 = vpow.pop %v1388
      %1390 = vadd.xlane.f32.xlu0 %v1389
      %v1391 = vpop.xlane.xlu0 %1390
      %v1392 = vrcp.pop %v1391
      %v1393 = vmul.f32 %v1389, %v1392
      %1394 = vst [vmem:[%s224] sm:$0xff] %v1393
      %p1395 = scmp.lt.s32.totalorder %s16, 1
      %s1396 = scalar_select %p1395, %s16, 1
      %s1397 = smul.addr %s1396, 8
      %s1398 = scalar_lea.vmem %s5, %s1397
      // Predicated region
      $region41: #{classifier_forward.1} parent=39 // pred_check
        %p1399 = pneg %p144
      $region42: #{classifier_forward.1} parent=39 // pred_check_branch
        %1401 = sbr.rel (%p1399) target = $region44
      $region43: #{classifier_forward.1} parent=39 // pred_region
        _
      $region44: #{classifier_forward.1} parent=39 // pred_fallthru
        _
    $region40: #{classifier_forward.1} parent=5 // pred_fallthru
      _
    %p1402 = scmp.le.s32.totalorder 2, %s11
    // Predicated region
    $region45: #{classifier_forward.1} parent=5 // pred_check
      %p1403 = pneg %p1402
    $region46: #{classifier_forward.1} parent=5 // pred_check_branch
      %1405 = sbr.rel (%p1403) target = $region48
    $region47: #{classifier_forward.1} parent=5 // pred_region
      %s1406 = ssub.s32 %s11, 2
      // Predicated region
      $region49: #{classifier_forward.1} parent=47 // pred_check
        %p1407 = pneg %p150
      $region50: #{classifier_forward.1} parent=47 // pred_check_branch
        %1409 = sbr.rel (%p1407) target = $region52
      $region51: #{classifier_forward.1} parent=47 // pred_region
        %p1410 = scmp.lt.s32.totalorder %s17, 1
        %s1411 = scalar_select %p1410, %s17, 1
        %s1412 = smul.addr %s1411, 8
        %s1413 = scalar_lea.vmem %s5, %s1412
      $region52: #{classifier_forward.1} parent=47 // pred_fallthru
        _
    $region48: #{classifier_forward.1} parent=5 // pred_fallthru
      _
  $region6: #{classifier_forward.1} parent=0 // loop_footer
    %s15 = sadd.s32 1, %s11
  $region7: #{classifier_forward.1} parent=0 // loop_footer_branch
    %10 = sbr.rel target = $region3
  $region8: #{classifier_forward.1} parent=0 // loop_exit
    _

</llo_original>
